<compile_context>
chip_gen: v7x
topology: tpu7x:2x2x1
jax: 0.10.0
libtpu: 0.0.40
codegen_flags: <defaults>
</compile_context>

<pallas_src>
import functools

import jax
import jax.numpy as jnp
from jax.experimental import pallas as pl
from jax.experimental.pallas import tpu as pltpu

_LANE = 128


def _round_up(x, m):
    return (x + m - 1) // m * m


def _layernorm(x, w, b, eps=1e-5):
    mu = jnp.mean(x, axis=-1, keepdims=True)
    var = jnp.mean((x - mu) ** 2, axis=-1, keepdims=True)   # biased var, like torch LN
    return (x - mu) * jax.lax.rsqrt(var + eps) * w + b


def _transformer_lm_kernel(n_layer, n_head,
                           x_ref, bias_ref, vecs_ref,
                           wqkv_ref, wproj_ref, wff1_ref, wff2_ref,
                           lm_w_ref, finals_ref,
                           out_ref,
                           x_scr):
    """One grid step = one transformer layer over the whole (B*T, C) block."""
    l = pl.program_id(0)

    @pl.when(l == 0)
    def _():
        x_scr[...] = x_ref[...]

    x = x_scr[...]                               # (R, C) f32, R = B*T
    R, C = x.shape
    hs = C // n_head
    # NOTE: PyTorch reference scales scores by emb_dim**-0.5 (n_embd), not head_size.
    scale = jnp.float32(C) ** -0.5

    # packed per-layer vectors: rows 0..6 = ln1_w, ln1_b, bproj, ln2_w, ln2_b, bff2, bff1
    V = vecs_ref[...]                            # (8, 4C) f32
    ln1_w, ln1_b = V[0:1, :C], V[1:2, :C]
    bproj = V[2:3, :C]
    ln2_w, ln2_b = V[3:4, :C], V[4:5, :C]
    bff2 = V[5:6, :C]
    bff1 = V[6:7, :]                             # (1, 4C)

    bias = bias_ref[...]                         # (R, R) additive mask: 0 / -1e30

    # ---------------- multi-head causal self-attention -----------------
    h = _layernorm(x, ln1_w, ln1_b)
    hb = h.astype(jnp.bfloat16)                  # bf16 at MXU boundary, f32 accumulate
    qkv = jnp.dot(hb, wqkv_ref[...], preferred_element_type=jnp.float32)   # (R, 3C)
    q = qkv[:, :C]
    k = qkv[:, C:2 * C]
    v = qkv[:, 2 * C:]

    heads = []
    for hd in range(n_head):                     # static unroll; scores stay f32
        sl = slice(hd * hs, (hd + 1) * hs)
        wei = jnp.einsum('td,sd->ts', q[:, sl], k[:, sl],
                         preferred_element_type=jnp.float32) * scale + bias
        wei = wei - jnp.max(wei, axis=-1, keepdims=True)
        ew = jnp.exp(wei)
        inv = pl.reciprocal(jnp.sum(ew, axis=-1, keepdims=True), approx=True)
        # dropout(p=0.0 / eval) -> identity
        heads.append(jnp.dot(ew * inv, v[:, sl], preferred_element_type=jnp.float32))
    oh = jnp.concatenate(heads, axis=-1)         # (R, C): one projection matmul
    sa = jnp.dot(oh.astype(jnp.bfloat16), wproj_ref[...],
                 preferred_element_type=jnp.float32) + bproj
    x = x + sa

    # --------------------------- feed-forward ---------------------------
    h2 = _layernorm(x, ln2_w, ln2_b)
    f = jnp.dot(h2.astype(jnp.bfloat16), wff1_ref[...],
                preferred_element_type=jnp.float32) + bff1
    f = jnp.maximum(f, 0.0)
    f = jnp.dot(f.astype(jnp.bfloat16), wff2_ref[...],
                preferred_element_type=jnp.float32) + bff2
    x = x + f
    x_scr[...] = x

    # ----------------------- final LN + lm_head -------------------------
    @pl.when(l == n_layer - 1)
    def _():
        Fp = finals_ref[...]                     # (8, Vp): rows lnf_w, lnf_b, lm_b
        xf = _layernorm(x, Fp[0:1, :C], Fp[1:2, :C])
        out_ref[...] = jnp.dot(xf.astype(jnp.bfloat16), lm_w_ref[...],
                               preferred_element_type=jnp.float32) + Fp[2:3, :]


def init_params(key, vocab_size, n_embd, block_size, n_layer, n_head):
    C, Vc, T, L = n_embd, vocab_size, block_size, n_layer
    Fh = 4 * C
    Vp = _round_up(Vc, _LANE)
    ks = jax.random.split(key, 16)

    def nrm(k, shape, scale=0.02, dtype=jnp.float32):
        return (jax.random.normal(k, shape, jnp.float32) * scale).astype(dtype)

    # packed per-layer f32 vectors (L, 8, 4C):
    # rows: 0 ln1_w, 1 ln1_b, 2 bproj, 3 ln2_w, 4 ln2_b, 5 bff2, 6 bff1, 7 unused
    vecs = jnp.zeros((L, 8, Fh), jnp.float32)
    vecs = vecs.at[:, 0, :C].set(1.0 + nrm(ks[0], (L, C), 0.05))
    vecs = vecs.at[:, 1, :C].set(nrm(ks[1], (L, C)))
    vecs = vecs.at[:, 2, :C].set(nrm(ks[2], (L, C)))
    vecs = vecs.at[:, 3, :C].set(1.0 + nrm(ks[3], (L, C), 0.05))
    vecs = vecs.at[:, 4, :C].set(nrm(ks[4], (L, C)))
    vecs = vecs.at[:, 5, :C].set(nrm(ks[5], (L, C)))
    vecs = vecs.at[:, 6, :].set(nrm(ks[6], (L, Fh)))

    # packed finals (8, Vp): row 0 lnf_w (first C lanes), row 1 lnf_b, row 2 lm_b
    finals = jnp.zeros((8, Vp), jnp.float32)
    finals = finals.at[0, :C].set(1.0 + nrm(ks[7], (C,), 0.05))
    finals = finals.at[1, :C].set(nrm(ks[8], (C,)))
    finals = finals.at[2, :Vc].set(nrm(ks[9], (Vc,)))

    lm_w = jnp.zeros((C, Vp), jnp.bfloat16).at[:, :Vc].set(
        nrm(ks[10], (C, Vc), dtype=jnp.bfloat16))

    params = {
        'tok_emb': nrm(ks[11], (Vc, C)),
        'pos_emb': nrm(ks[12], (T, C)),
        'vecs': vecs,
        'wqkv': nrm(ks[13], (L, C, 3 * C), dtype=jnp.bfloat16),   # fused q|k|v
        'wproj': nrm(ks[14], (L, C, C), dtype=jnp.bfloat16),
        'wff1': nrm(ks[15], (L, C, Fh), dtype=jnp.bfloat16),
        'wff2': nrm(jax.random.fold_in(key, 99), (L, Fh, C), dtype=jnp.bfloat16),
        'lm_w': lm_w,                                             # (C, Vp) lane-padded
        'finals': finals,
    }
    return params


def bigram_lm_forward(idx, params, vocab_size, n_layer, n_head, targets=None):
    B, T = idx.shape
    C = params['tok_emb'].shape[-1]
    Fh = params['wff1'].shape[-1]
    Vp = params['lm_w'].shape[-1]
    R = B * T

    # glue: embedding lookups + positional add in plain JAX
    # TODO(synk): embedding gather could be fused via scalar-prefetched idx; negligible at T=8.
    tok = jnp.take(params['tok_emb'], idx, axis=0)        # (B, T, C)
    pos = params['pos_emb'][:T]                           # (T, C)
    x2d = (tok + pos).astype(jnp.float32).reshape(R, C)

    # additive attention bias: batch-block-diagonal AND causal -> 0, else -1e30
    r = jnp.arange(R)
    rb, rt = r // T, r % T
    ok = (rb[:, None] == rb[None, :]) & (rt[None, :] <= rt[:, None])
    bias = jnp.where(ok, 0.0, -1e30).astype(jnp.float32)  # (R, R)

    def per_layer(tail):
        n = len(tail)
        return pl.BlockSpec((None,) + tail, lambda l, _n=n: (l,) + (0,) * _n)

    def shared(shape):
        n = len(shape)
        return pl.BlockSpec(shape, lambda l, _n=n: (0,) * _n)

    in_specs = [
        shared((R, C)),            # x (whole batch folded into the block)
        shared((R, R)),            # additive attention bias
        per_layer((8, Fh)),        # packed per-layer vectors
        per_layer((C, 3 * C)),     # fused wqkv
        per_layer((C, C)),         # wproj
        per_layer((C, Fh)),        # wff1
        per_layer((Fh, C)),        # wff2
        shared((C, Vp)),           # lm_w
        shared((8, Vp)),           # packed finals (lnf_w, lnf_b, lm_b)
    ]
    out_spec = shared((R, Vp))

    kernel = functools.partial(_transformer_lm_kernel, n_layer, n_head)
    logits_padded = pl.pallas_call(
        kernel,
        out_shape=jax.ShapeDtypeStruct((R, Vp), jnp.float32),
        grid_spec=pltpu.PrefetchScalarGridSpec(
            num_scalar_prefetch=0,
            grid=(n_layer,),                       # layers only; batch lives in the block
            in_specs=in_specs,
            out_specs=out_spec,
            scratch_shapes=[pltpu.VMEM((R, C), jnp.float32)]),     # residual stream
        compiler_params=pltpu.CompilerParams(
            dimension_semantics=("arbitrary",)),
    )(x2d, bias, params['vecs'], params['wqkv'], params['wproj'],
      params['wff1'], params['wff2'], params['lm_w'], params['finals'])

    logits = logits_padded.reshape(B, T, Vp)[:, :, :vocab_size]   # strip lane padding
    loss = None
    # TODO(synk): cross-entropy loss branch (targets is not None) not implemented;
    # this path matches the reference's targets=None inference behavior.
    return logits, loss


def _reference_forward(idx, params, vocab_size, n_layer, n_head):
    """Plain-JAX reference of the same forward pass (f32 math, bf16-cast weights)."""
    B, T = idx.shape
    C = params['tok_emb'].shape[-1]
    hs = C // n_head
    f32 = lambda a: a.astype(jnp.float32)
    x = (jnp.take(params['tok_emb'], idx, axis=0) + params['pos_emb'][:T]).astype(jnp.float32)
    causal = jnp.tril(jnp.ones((T, T), bool))

    def ln(v, w, b, eps=1e-5):
        mu = v.mean(-1, keepdims=True)
        var = ((v - mu) ** 2).mean(-1, keepdims=True)
        return (v - mu) / jnp.sqrt(var + eps) * w + b

    for l in range(n_layer):
        Vr = params['vecs'][l]
        ln1_w, ln1_b, bproj = Vr[0, :C], Vr[1, :C], Vr[2, :C]
        ln2_w, ln2_b, bff2 = Vr[3, :C], Vr[4, :C], Vr[5, :C]
        bff1 = Vr[6, :]
        h = ln(x, ln1_w, ln1_b)
        qkv = h @ f32(params['wqkv'][l])
        q, k, v = qkv[..., :C], qkv[..., C:2 * C], qkv[..., 2 * C:]
        outs = []
        for hd in range(n_head):
            sl = slice(hd * hs, (hd + 1) * hs)
            wei = jnp.einsum('btd,bsd->bts', q[..., sl], k[..., sl]) * (C ** -0.5)
            wei = jnp.where(causal, wei, -jnp.inf)
            wei = jax.nn.softmax(wei, axis=-1)
            outs.append(jnp.einsum('bts,bsd->btd', wei, v[..., sl]))
        oh = jnp.concatenate(outs, axis=-1)
        x = x + oh @ f32(params['wproj'][l]) + bproj
        h2 = ln(x, ln2_w, ln2_b)
        ff = jnp.maximum(h2 @ f32(params['wff1'][l]) + bff1, 0.0)
        x = x + ff @ f32(params['wff2'][l]) + bff2
    Fr = params['finals']
    xf = ln(x, Fr[0, :C], Fr[1, :C])
    logits = xf @ f32(params['lm_w']) + Fr[2]
    return logits[:, :, :vocab_size]


if __name__ == "__main__":
    # small, module-consistent shapes
    vocab_size = 65
    n_embd = 32
    block_size = 8
    n_layer = 2
    n_head = 4

    key = jax.random.PRNGKey(0)
    pkey, ikey = jax.random.split(key)
    params = init_params(pkey, vocab_size, n_embd, block_size, n_layer, n_head)

    batch = 2
    idx = jax.random.randint(ikey, (batch, block_size), 0, vocab_size, dtype=jnp.int32)

    logits, loss = bigram_lm_forward(idx, params, vocab_size, n_layer, n_head)
    logits = jax.block_until_ready(logits)

    assert logits.shape == (batch, block_size, vocab_size), logits.shape
    assert loss is None
    assert bool(jnp.all(jnp.isfinite(logits)))

    ref = _reference_forward(idx, params, vocab_size, n_layer, n_head)
    assert bool(jnp.allclose(logits, ref, rtol=5e-2, atol=5e-2)), (
        "max abs diff vs reference: %f" % float(jnp.max(jnp.abs(logits - ref))))

    print("KERNEL_OK")
</pallas_src>

<mosaic_0001>
module attributes {stable_mosaic.version = 11 : i64} {
  func.func @_transformer_lm_kernel(%arg0: i32, %arg1: memref<16x32xf32, #tpu.memory_space<vmem>>, %arg2: memref<16x16xf32, #tpu.memory_space<vmem>>, %arg3: memref<1x8x128xf32, #tpu.memory_space<vmem>>, %arg4: memref<1x32x96xbf16, #tpu.memory_space<vmem>>, %arg5: memref<1x32x32xbf16, #tpu.memory_space<vmem>>, %arg6: memref<1x32x128xbf16, #tpu.memory_space<vmem>>, %arg7: memref<1x128x32xbf16, #tpu.memory_space<vmem>>, %arg8: memref<32x128xbf16, #tpu.memory_space<vmem>>, %arg9: memref<8x128xf32, #tpu.memory_space<vmem>>, %arg10: memref<16x128xf32, #tpu.memory_space<vmem>>, %arg11: memref<16x32xf32, #tpu.memory_space<vmem>>) attributes {dimension_semantics = [#tpu.dimension_semantics<arbitrary>], iteration_bounds = array<i64: 2>, scalar_prefetch = 0 : i64, scratch_operands = 1 : i64, tpu.core_type = #tpu.core_type<tc>, window_params = [{pipeline_mode = #tpu.pipeline_mode<synchronous>, transform_indices = @transform_0, window_bounds = array<i64: 16, 32>}, {pipeline_mode = #tpu.pipeline_mode<synchronous>, transform_indices = @transform_1, window_bounds = array<i64: 16, 16>}, {transform_indices = @transform_2, window_bounds = array<i64: 1, 8, 128>}, {transform_indices = @transform_3, window_bounds = array<i64: 1, 32, 96>}, {transform_indices = @transform_4, window_bounds = array<i64: 1, 32, 32>}, {transform_indices = @transform_5, window_bounds = array<i64: 1, 32, 128>}, {transform_indices = @transform_6, window_bounds = array<i64: 1, 128, 32>}, {pipeline_mode = #tpu.pipeline_mode<synchronous>, transform_indices = @transform_7, window_bounds = array<i64: 32, 128>}, {pipeline_mode = #tpu.pipeline_mode<synchronous>, transform_indices = @transform_8, window_bounds = array<i64: 8, 128>}, {pipeline_mode = #tpu.pipeline_mode<synchronous>, transform_indices = @transform_9, window_bounds = array<i64: 16, 128>}]} {
    %c0_i32 = arith.constant 0 : i32
    %0 = arith.cmpi eq, %arg0, %c0_i32 : i32
    %1 = arith.extui %0 : i1 to i32
    %c0_i32_0 = arith.constant 0 : i32
    %2 = arith.cmpi ne, %1, %c0_i32_0 : i32
    scf.if %2 {
      %c0_54 = arith.constant 0 : index
      %c0_55 = arith.constant 0 : index
      %165 = vector.load %arg1[%c0_54, %c0_55] : memref<16x32xf32, #tpu.memory_space<vmem>>, vector<16x32xf32>
      %c0_56 = arith.constant 0 : index
      %c0_57 = arith.constant 0 : index
      %166 = vector.load %arg11[%c0_56, %c0_57] : memref<16x32xf32, #tpu.memory_space<vmem>>, vector<16x32xf32>
      tpu.vector_store %arg11[%c0_56, %c0_57], %165 {strides = array<i32>} : memref<16x32xf32, #tpu.memory_space<vmem>>, vector<16x32xf32>,
    } else {
    }
    %c0 = arith.constant 0 : index
    %c0_1 = arith.constant 0 : index
    %3 = vector.load %arg11[%c0, %c0_1] : memref<16x32xf32, #tpu.memory_space<vmem>>, vector<16x32xf32>
    %cst = arith.constant 3.200000e+01 : f32
    %cst_2 = arith.constant -5.000000e-01 : f32
    %4 = math.powf %cst, %cst_2 : f32
    %c0_3 = arith.constant 0 : index
    %c0_4 = arith.constant 0 : index
    %c0_5 = arith.constant 0 : index
    %5 = vector.load %arg3[%c0_3, %c0_4, %c0_5] : memref<1x8x128xf32, #tpu.memory_space<vmem>>, vector<1x8x128xf32>
    %6 = vector.shape_cast %5 : vector<1x8x128xf32> to vector<8x128xf32>
    %7 = vector.extract_strided_slice %6 {offsets = [0, 0], sizes = [1, 32], strides = [1, 1]} : vector<8x128xf32> to vector<1x32xf32>
    %8 = vector.extract_strided_slice %6 {offsets = [1, 0], sizes = [1, 32], strides = [1, 1]} : vector<8x128xf32> to vector<1x32xf32>
    %9 = vector.extract_strided_slice %6 {offsets = [2, 0], sizes = [1, 32], strides = [1, 1]} : vector<8x128xf32> to vector<1x32xf32>
    %10 = vector.extract_strided_slice %6 {offsets = [3, 0], sizes = [1, 32], strides = [1, 1]} : vector<8x128xf32> to vector<1x32xf32>
    %11 = vector.extract_strided_slice %6 {offsets = [4, 0], sizes = [1, 32], strides = [1, 1]} : vector<8x128xf32> to vector<1x32xf32>
    %12 = vector.extract_strided_slice %6 {offsets = [5, 0], sizes = [1, 32], strides = [1, 1]} : vector<8x128xf32> to vector<1x32xf32>
    %13 = vector.extract_strided_slice %6 {offsets = [6, 0], sizes = [1, 128], strides = [1, 1]} : vector<8x128xf32> to vector<1x128xf32>
    %c0_6 = arith.constant 0 : index
    %c0_7 = arith.constant 0 : index
    %14 = vector.load %arg2[%c0_6, %c0_7] : memref<16x16xf32, #tpu.memory_space<vmem>>, vector<16x16xf32>
    %cst_8 = arith.constant dense<0.000000e+00> : vector<16xf32>
    %15 = vector.multi_reduction <add>, %3, %cst_8 [1] : vector<16x32xf32> to vector<16xf32>
    %16 = vector.shape_cast %15 : vector<16xf32> to vector<16x1xf32>
    %cst_9 = arith.constant 3.200000e+01 : f32
    %17 = vector.broadcast %cst_9 : f32 to vector<16x1xf32>
    %18 = arith.divf %16, %17 : vector<16x1xf32>
    %19 = vector.broadcast %18 : vector<16x1xf32> to vector<16x32xf32>
    %20 = arith.subf %3, %19 : vector<16x32xf32>
    %21 = arith.mulf %20, %20 : vector<16x32xf32>
    %cst_10 = arith.constant dense<0.000000e+00> : vector<16xf32>
    %22 = vector.multi_reduction <add>, %21, %cst_10 [1] : vector<16x32xf32> to vector<16xf32>
    %23 = vector.shape_cast %22 : vector<16xf32> to vector<16x1xf32>
    %cst_11 = arith.constant 3.200000e+01 : f32
    %24 = vector.broadcast %cst_11 : f32 to vector<16x1xf32>
    %25 = arith.divf %23, %24 : vector<16x1xf32>
    %26 = vector.broadcast %18 : vector<16x1xf32> to vector<16x32xf32>
    %27 = arith.subf %3, %26 : vector<16x32xf32>
    %cst_12 = arith.constant 9.99999974E-6 : f32
    %28 = vector.broadcast %cst_12 : f32 to vector<16x1xf32>
    %29 = arith.addf %25, %28 : vector<16x1xf32>
    %30 = math.rsqrt %29 : vector<16x1xf32>
    %31 = vector.broadcast %30 : vector<16x1xf32> to vector<16x32xf32>
    %32 = arith.mulf %27, %31 : vector<16x32xf32>
    %33 = vector.broadcast %7 : vector<1x32xf32> to vector<16x32xf32>
    %34 = arith.mulf %32, %33 : vector<16x32xf32>
    %35 = vector.broadcast %8 : vector<1x32xf32> to vector<16x32xf32>
    %36 = arith.addf %34, %35 : vector<16x32xf32>
    %37 = arith.truncf %36 : vector<16x32xf32> to vector<16x32xbf16>
    %c0_13 = arith.constant 0 : index
    %c0_14 = arith.constant 0 : index
    %c0_15 = arith.constant 0 : index
    %38 = vector.load %arg4[%c0_13, %c0_14, %c0_15] : memref<1x32x96xbf16, #tpu.memory_space<vmem>>, vector<1x32x96xbf16>
    %39 = vector.shape_cast %38 : vector<1x32x96xbf16> to vector<32x96xbf16>
    %cst_16 = arith.constant dense<0.000000e+00> : vector<16x96xf32>
    %40 = tpu.matmul %37, %39, %cst_16 {dimension_numbers = #tpu.dot_dimension_numbers<[1], [0], [0], [1], [0, 0, 1, 1], [], []>} : vector<16x32xbf16>, vector<32x96xbf16>, vector<16x96xf32> -> vector<16x96xf32>
    %41 = vector.extract_strided_slice %40 {offsets = [0, 0], sizes = [16, 32], strides = [1, 1]} : vector<16x96xf32> to vector<16x32xf32>
    %42 = vector.extract_strided_slice %40 {offsets = [0, 32], sizes = [16, 32], strides = [1, 1]} : vector<16x96xf32> to vector<16x32xf32>
    %43 = vector.extract_strided_slice %40 {offsets = [0, 64], sizes = [16, 32], strides = [1, 1]} : vector<16x96xf32> to vector<16x32xf32>
    %44 = vector.extract_strided_slice %41 {offsets = [0, 0], sizes = [16, 8], strides = [1, 1]} : vector<16x32xf32> to vector<16x8xf32>
    %45 = vector.extract_strided_slice %42 {offsets = [0, 0], sizes = [16, 8], strides = [1, 1]} : vector<16x32xf32> to vector<16x8xf32>
    "tpu.trace_start"() <{level = 10 : i32, message = "td,sd->ts"}> : () -> ()
    %cst_17 = arith.constant dense<0.000000e+00> : vector<16x16xf32>
    %46 = tpu.matmul %44, %45, %cst_17 {dimension_numbers = #tpu.dot_dimension_numbers<[1], [1], [0], [0], [0, 0, 1, 0], [], []>} : vector<16x8xf32>, vector<16x8xf32>, vector<16x16xf32> -> vector<16x16xf32>
    "tpu.trace_stop"() : () -> ()
    %47 = vector.broadcast %4 : f32 to vector<16x16xf32>
    %48 = arith.mulf %46, %47 : vector<16x16xf32>
    %49 = arith.addf %48, %14 : vector<16x16xf32>
    %cst_18 = arith.constant dense<0xFF800000> : vector<16xf32>
    %50 = vector.multi_reduction <maximumf>, %49, %cst_18 [1] : vector<16x16xf32> to vector<16xf32>
    %51 = vector.shape_cast %50 : vector<16xf32> to vector<16x1xf32>
    %52 = vector.broadcast %51 : vector<16x1xf32> to vector<16x16xf32>
    %53 = arith.subf %49, %52 : vector<16x16xf32>
    %54 = math.exp %53 : vector<16x16xf32>
    %cst_19 = arith.constant dense<0.000000e+00> : vector<16xf32>
    %55 = vector.multi_reduction <add>, %54, %cst_19 [1] : vector<16x16xf32> to vector<16xf32>
    %56 = vector.shape_cast %55 : vector<16xf32> to vector<16x1xf32>
    %57 = tpu.reciprocal %56 {approx = true} : vector<16x1xf32> -> vector<16x1xf32>
    %58 = vector.broadcast %57 : vector<16x1xf32> to vector<16x16xf32>
    %59 = arith.mulf %54, %58 : vector<16x16xf32>
    %60 = vector.extract_strided_slice %43 {offsets = [0, 0], sizes = [16, 8], strides = [1, 1]} : vector<16x32xf32> to vector<16x8xf32>
    %cst_20 = arith.constant dense<0.000000e+00> : vector<16x8xf32>
    %61 = tpu.matmul %59, %60, %cst_20 {dimension_numbers = #tpu.dot_dimension_numbers<[1], [0], [0], [1], [0, 0, 1, 1], [], []>} : vector<16x16xf32>, vector<16x8xf32>, vector<16x8xf32> -> vector<16x8xf32>
    %62 = vector.extract_strided_slice %41 {offsets = [0, 8], sizes = [16, 8], strides = [1, 1]} : vector<16x32xf32> to vector<16x8xf32>
    %63 = vector.extract_strided_slice %42 {offsets = [0, 8], sizes = [16, 8], strides = [1, 1]} : vector<16x32xf32> to vector<16x8xf32>
    "tpu.trace_start"() <{level = 10 : i32, message = "td,sd->ts"}> : () -> ()
    %cst_21 = arith.constant dense<0.000000e+00> : vector<16x16xf32>
    %64 = tpu.matmul %62, %63, %cst_21 {dimension_numbers = #tpu.dot_dimension_numbers<[1], [1], [0], [0], [0, 0, 1, 0], [], []>} : vector<16x8xf32>, vector<16x8xf32>, vector<16x16xf32> -> vector<16x16xf32>
    "tpu.trace_stop"() : () -> ()
    %65 = vector.broadcast %4 : f32 to vector<16x16xf32>
    %66 = arith.mulf %64, %65 : vector<16x16xf32>
    %67 = arith.addf %66, %14 : vector<16x16xf32>
    %cst_22 = arith.constant dense<0xFF800000> : vector<16xf32>
    %68 = vector.multi_reduction <maximumf>, %67, %cst_22 [1] : vector<16x16xf32> to vector<16xf32>
    %69 = vector.shape_cast %68 : vector<16xf32> to vector<16x1xf32>
    %70 = vector.broadcast %69 : vector<16x1xf32> to vector<16x16xf32>
    %71 = arith.subf %67, %70 : vector<16x16xf32>
    %72 = math.exp %71 : vector<16x16xf32>
    %cst_23 = arith.constant dense<0.000000e+00> : vector<16xf32>
    %73 = vector.multi_reduction <add>, %72, %cst_23 [1] : vector<16x16xf32> to vector<16xf32>
    %74 = vector.shape_cast %73 : vector<16xf32> to vector<16x1xf32>
    %75 = tpu.reciprocal %74 {approx = true} : vector<16x1xf32> -> vector<16x1xf32>
    %76 = vector.broadcast %75 : vector<16x1xf32> to vector<16x16xf32>
    %77 = arith.mulf %72, %76 : vector<16x16xf32>
    %78 = vector.extract_strided_slice %43 {offsets = [0, 8], sizes = [16, 8], strides = [1, 1]} : vector<16x32xf32> to vector<16x8xf32>
    %cst_24 = arith.constant dense<0.000000e+00> : vector<16x8xf32>
    %79 = tpu.matmul %77, %78, %cst_24 {dimension_numbers = #tpu.dot_dimension_numbers<[1], [0], [0], [1], [0, 0, 1, 1], [], []>} : vector<16x16xf32>, vector<16x8xf32>, vector<16x8xf32> -> vector<16x8xf32>
    %80 = vector.extract_strided_slice %41 {offsets = [0, 16], sizes = [16, 8], strides = [1, 1]} : vector<16x32xf32> to vector<16x8xf32>
    %81 = vector.extract_strided_slice %42 {offsets = [0, 16], sizes = [16, 8], strides = [1, 1]} : vector<16x32xf32> to vector<16x8xf32>
    "tpu.trace_start"() <{level = 10 : i32, message = "td,sd->ts"}> : () -> ()
    %cst_25 = arith.constant dense<0.000000e+00> : vector<16x16xf32>
    %82 = tpu.matmul %80, %81, %cst_25 {dimension_numbers = #tpu.dot_dimension_numbers<[1], [1], [0], [0], [0, 0, 1, 0], [], []>} : vector<16x8xf32>, vector<16x8xf32>, vector<16x16xf32> -> vector<16x16xf32>
    "tpu.trace_stop"() : () -> ()
    %83 = vector.broadcast %4 : f32 to vector<16x16xf32>
    %84 = arith.mulf %82, %83 : vector<16x16xf32>
    %85 = arith.addf %84, %14 : vector<16x16xf32>
    %cst_26 = arith.constant dense<0xFF800000> : vector<16xf32>
    %86 = vector.multi_reduction <maximumf>, %85, %cst_26 [1] : vector<16x16xf32> to vector<16xf32>
    %87 = vector.shape_cast %86 : vector<16xf32> to vector<16x1xf32>
    %88 = vector.broadcast %87 : vector<16x1xf32> to vector<16x16xf32>
    %89 = arith.subf %85, %88 : vector<16x16xf32>
    %90 = math.exp %89 : vector<16x16xf32>
    %cst_27 = arith.constant dense<0.000000e+00> : vector<16xf32>
    %91 = vector.multi_reduction <add>, %90, %cst_27 [1] : vector<16x16xf32> to vector<16xf32>
    %92 = vector.shape_cast %91 : vector<16xf32> to vector<16x1xf32>
    %93 = tpu.reciprocal %92 {approx = true} : vector<16x1xf32> -> vector<16x1xf32>
    %94 = vector.broadcast %93 : vector<16x1xf32> to vector<16x16xf32>
    %95 = arith.mulf %90, %94 : vector<16x16xf32>
    %96 = vector.extract_strided_slice %43 {offsets = [0, 16], sizes = [16, 8], strides = [1, 1]} : vector<16x32xf32> to vector<16x8xf32>
    %cst_28 = arith.constant dense<0.000000e+00> : vector<16x8xf32>
    %97 = tpu.matmul %95, %96, %cst_28 {dimension_numbers = #tpu.dot_dimension_numbers<[1], [0], [0], [1], [0, 0, 1, 1], [], []>} : vector<16x16xf32>, vector<16x8xf32>, vector<16x8xf32> -> vector<16x8xf32>
    %98 = vector.extract_strided_slice %41 {offsets = [0, 24], sizes = [16, 8], strides = [1, 1]} : vector<16x32xf32> to vector<16x8xf32>
    %99 = vector.extract_strided_slice %42 {offsets = [0, 24], sizes = [16, 8], strides = [1, 1]} : vector<16x32xf32> to vector<16x8xf32>
    "tpu.trace_start"() <{level = 10 : i32, message = "td,sd->ts"}> : () -> ()
    %cst_29 = arith.constant dense<0.000000e+00> : vector<16x16xf32>
    %100 = tpu.matmul %98, %99, %cst_29 {dimension_numbers = #tpu.dot_dimension_numbers<[1], [1], [0], [0], [0, 0, 1, 0], [], []>} : vector<16x8xf32>, vector<16x8xf32>, vector<16x16xf32> -> vector<16x16xf32>
    "tpu.trace_stop"() : () -> ()
    %101 = vector.broadcast %4 : f32 to vector<16x16xf32>
    %102 = arith.mulf %100, %101 : vector<16x16xf32>
    %103 = arith.addf %102, %14 : vector<16x16xf32>
    %cst_30 = arith.constant dense<0xFF800000> : vector<16xf32>
    %104 = vector.multi_reduction <maximumf>, %103, %cst_30 [1] : vector<16x16xf32> to vector<16xf32>
    %105 = vector.shape_cast %104 : vector<16xf32> to vector<16x1xf32>
    %106 = vector.broadcast %105 : vector<16x1xf32> to vector<16x16xf32>
    %107 = arith.subf %103, %106 : vector<16x16xf32>
    %108 = math.exp %107 : vector<16x16xf32>
    %cst_31 = arith.constant dense<0.000000e+00> : vector<16xf32>
    %109 = vector.multi_reduction <add>, %108, %cst_31 [1] : vector<16x16xf32> to vector<16xf32>
    %110 = vector.shape_cast %109 : vector<16xf32> to vector<16x1xf32>
    %111 = tpu.reciprocal %110 {approx = true} : vector<16x1xf32> -> vector<16x1xf32>
    %112 = vector.broadcast %111 : vector<16x1xf32> to vector<16x16xf32>
    %113 = arith.mulf %108, %112 : vector<16x16xf32>
    %114 = vector.extract_strided_slice %43 {offsets = [0, 24], sizes = [16, 8], strides = [1, 1]} : vector<16x32xf32> to vector<16x8xf32>
    %cst_32 = arith.constant dense<0.000000e+00> : vector<16x8xf32>
    %115 = tpu.matmul %113, %114, %cst_32 {dimension_numbers = #tpu.dot_dimension_numbers<[1], [0], [0], [1], [0, 0, 1, 1], [], []>} : vector<16x16xf32>, vector<16x8xf32>, vector<16x8xf32> -> vector<16x8xf32>
    %116 = tpu.concatenate %61, %79, %97, %115 in 1 : vector<16x8xf32>, vector<16x8xf32>, vector<16x8xf32>, vector<16x8xf32> -> vector<16x32xf32>
    %117 = arith.truncf %116 : vector<16x32xf32> to vector<16x32xbf16>
    %c0_33 = arith.constant 0 : index
    %c0_34 = arith.constant 0 : index
    %c0_35 = arith.constant 0 : index
    %118 = vector.load %arg5[%c0_33, %c0_34, %c0_35] : memref<1x32x32xbf16, #tpu.memory_space<vmem>>, vector<1x32x32xbf16>
    %119 = vector.shape_cast %118 : vector<1x32x32xbf16> to vector<32x32xbf16>
    %cst_36 = arith.constant dense<0.000000e+00> : vector<16x32xf32>
    %120 = tpu.matmul %117, %119, %cst_36 {dimension_numbers = #tpu.dot_dimension_numbers<[1], [0], [0], [1], [0, 0, 1, 1], [], []>} : vector<16x32xbf16>, vector<32x32xbf16>, vector<16x32xf32> -> vector<16x32xf32>
    %121 = vector.broadcast %9 : vector<1x32xf32> to vector<16x32xf32>
    %122 = arith.addf %120, %121 : vector<16x32xf32>
    %123 = arith.addf %3, %122 : vector<16x32xf32>
    %cst_37 = arith.constant dense<0.000000e+00> : vector<16xf32>
    %124 = vector.multi_reduction <add>, %123, %cst_37 [1] : vector<16x32xf32> to vector<16xf32>
    %125 = vector.shape_cast %124 : vector<16xf32> to vector<16x1xf32>
    %cst_38 = arith.constant 3.200000e+01 : f32
    %126 = vector.broadcast %cst_38 : f32 to vector<16x1xf32>
    %127 = arith.divf %125, %126 : vector<16x1xf32>
    %128 = vector.broadcast %127 : vector<16x1xf32> to vector<16x32xf32>
    %129 = arith.subf %123, %128 : vector<16x32xf32>
    %130 = arith.mulf %129, %129 : vector<16x32xf32>
    %cst_39 = arith.constant dense<0.000000e+00> : vector<16xf32>
    %131 = vector.multi_reduction <add>, %130, %cst_39 [1] : vector<16x32xf32> to vector<16xf32>
    %132 = vector.shape_cast %131 : vector<16xf32> to vector<16x1xf32>
    %cst_40 = arith.constant 3.200000e+01 : f32
    %133 = vector.broadcast %cst_40 : f32 to vector<16x1xf32>
    %134 = arith.divf %132, %133 : vector<16x1xf32>
    %135 = vector.broadcast %127 : vector<16x1xf32> to vector<16x32xf32>
    %136 = arith.subf %123, %135 : vector<16x32xf32>
    %cst_41 = arith.constant 9.99999974E-6 : f32
    %137 = vector.broadcast %cst_41 : f32 to vector<16x1xf32>
    %138 = arith.addf %134, %137 : vector<16x1xf32>
    %139 = math.rsqrt %138 : vector<16x1xf32>
    %140 = vector.broadcast %139 : vector<16x1xf32> to vector<16x32xf32>
    %141 = arith.mulf %136, %140 : vector<16x32xf32>
    %142 = vector.broadcast %10 : vector<1x32xf32> to vector<16x32xf32>
    %143 = arith.mulf %141, %142 : vector<16x32xf32>
    %144 = vector.broadcast %11 : vector<1x32xf32> to vector<16x32xf32>
    %145 = arith.addf %143, %144 : vector<16x32xf32>
    %146 = arith.truncf %145 : vector<16x32xf32> to vector<16x32xbf16>
    %c0_42 = arith.constant 0 : index
    %c0_43 = arith.constant 0 : index
    %c0_44 = arith.constant 0 : index
    %147 = vector.load %arg6[%c0_42, %c0_43, %c0_44] : memref<1x32x128xbf16, #tpu.memory_space<vmem>>, vector<1x32x128xbf16>
    %148 = vector.shape_cast %147 : vector<1x32x128xbf16> to vector<32x128xbf16>
    %cst_45 = arith.constant dense<0.000000e+00> : vector<16x128xf32>
    %149 = tpu.matmul %146, %148, %cst_45 {dimension_numbers = #tpu.dot_dimension_numbers<[1], [0], [0], [1], [0, 0, 1, 1], [], []>} : vector<16x32xbf16>, vector<32x128xbf16>, vector<16x128xf32> -> vector<16x128xf32>
    %150 = vector.broadcast %13 : vector<1x128xf32> to vector<16x128xf32>
    %151 = arith.addf %149, %150 : vector<16x128xf32>
    %cst_46 = arith.constant 0.000000e+00 : f32
    %152 = vector.broadcast %cst_46 : f32 to vector<16x128xf32>
    %153 = arith.maximumf %151, %152 : vector<16x128xf32>
    %154 = arith.truncf %153 : vector<16x128xf32> to vector<16x128xbf16>
    %c0_47 = arith.constant 0 : index
    %c0_48 = arith.constant 0 : index
    %c0_49 = arith.constant 0 : index
    %155 = vector.load %arg7[%c0_47, %c0_48, %c0_49] : memref<1x128x32xbf16, #tpu.memory_space<vmem>>, vector<1x128x32xbf16>
    %156 = vector.shape_cast %155 : vector<1x128x32xbf16> to vector<128x32xbf16>
    %cst_50 = arith.constant dense<0.000000e+00> : vector<16x32xf32>
    %157 = tpu.matmul %154, %156, %cst_50 {dimension_numbers = #tpu.dot_dimension_numbers<[1], [0], [0], [1], [0, 0, 1, 1], [], []>} : vector<16x128xbf16>, vector<128x32xbf16>, vector<16x32xf32> -> vector<16x32xf32>
    %158 = vector.broadcast %12 : vector<1x32xf32> to vector<16x32xf32>
    %159 = arith.addf %157, %158 : vector<16x32xf32>
    %160 = arith.addf %123, %159 : vector<16x32xf32>
    %c0_51 = arith.constant 0 : index
    %c0_52 = arith.constant 0 : index
    %161 = vector.load %arg11[%c0_51, %c0_52] : memref<16x32xf32, #tpu.memory_space<vmem>>, vector<16x32xf32>
    tpu.vector_store %arg11[%c0_51, %c0_52], %160 {strides = array<i32>} : memref<16x32xf32, #tpu.memory_space<vmem>>, vector<16x32xf32>,
    %c1_i32 = arith.constant 1 : i32
    %162 = arith.cmpi eq, %arg0, %c1_i32 : i32
    %163 = arith.extui %162 : i1 to i32
    %c0_i32_53 = arith.constant 0 : i32
    %164 = arith.cmpi ne, %163, %c0_i32_53 : i32
    scf.if %164 {
      %c0_54 = arith.constant 0 : index
      %c0_55 = arith.constant 0 : index
      %165 = vector.load %arg9[%c0_54, %c0_55] : memref<8x128xf32, #tpu.memory_space<vmem>>, vector<8x128xf32>
      %166 = vector.extract_strided_slice %165 {offsets = [0, 0], sizes = [1, 32], strides = [1, 1]} : vector<8x128xf32> to vector<1x32xf32>
      %167 = vector.extract_strided_slice %165 {offsets = [1, 0], sizes = [1, 32], strides = [1, 1]} : vector<8x128xf32> to vector<1x32xf32>
      %cst_56 = arith.constant dense<0.000000e+00> : vector<16xf32>
      %168 = vector.multi_reduction <add>, %160, %cst_56 [1] : vector<16x32xf32> to vector<16xf32>
      %169 = vector.shape_cast %168 : vector<16xf32> to vector<16x1xf32>
      %cst_57 = arith.constant 3.200000e+01 : f32
      %170 = vector.broadcast %cst_57 : f32 to vector<16x1xf32>
      %171 = arith.divf %169, %170 : vector<16x1xf32>
      %172 = vector.broadcast %171 : vector<16x1xf32> to vector<16x32xf32>
      %173 = arith.subf %160, %172 : vector<16x32xf32>
      %174 = arith.mulf %173, %173 : vector<16x32xf32>
      %cst_58 = arith.constant dense<0.000000e+00> : vector<16xf32>
      %175 = vector.multi_reduction <add>, %174, %cst_58 [1] : vector<16x32xf32> to vector<16xf32>
      %176 = vector.shape_cast %175 : vector<16xf32> to vector<16x1xf32>
      %cst_59 = arith.constant 3.200000e+01 : f32
      %177 = vector.broadcast %cst_59 : f32 to vector<16x1xf32>
      %178 = arith.divf %176, %177 : vector<16x1xf32>
      %179 = vector.broadcast %171 : vector<16x1xf32> to vector<16x32xf32>
      %180 = arith.subf %160, %179 : vector<16x32xf32>
      %cst_60 = arith.constant 9.99999974E-6 : f32
      %181 = vector.broadcast %cst_60 : f32 to vector<16x1xf32>
      %182 = arith.addf %178, %181 : vector<16x1xf32>
      %183 = math.rsqrt %182 : vector<16x1xf32>
      %184 = vector.broadcast %183 : vector<16x1xf32> to vector<16x32xf32>
      %185 = arith.mulf %180, %184 : vector<16x32xf32>
      %186 = vector.broadcast %166 : vector<1x32xf32> to vector<16x32xf32>
      %187 = arith.mulf %185, %186 : vector<16x32xf32>
      %188 = vector.broadcast %167 : vector<1x32xf32> to vector<16x32xf32>
      %189 = arith.addf %187, %188 : vector<16x32xf32>
      %190 = arith.truncf %189 : vector<16x32xf32> to vector<16x32xbf16>
      %c0_61 = arith.constant 0 : index
      %c0_62 = arith.constant 0 : index
      %191 = vector.load %arg8[%c0_61, %c0_62] : memref<32x128xbf16, #tpu.memory_space<vmem>>, vector<32x128xbf16>
      %cst_63 = arith.constant dense<0.000000e+00> : vector<16x128xf32>
      %192 = tpu.matmul %190, %191, %cst_63 {dimension_numbers = #tpu.dot_dimension_numbers<[1], [0], [0], [1], [0, 0, 1, 1], [], []>} : vector<16x32xbf16>, vector<32x128xbf16>, vector<16x128xf32> -> vector<16x128xf32>
      %193 = vector.extract_strided_slice %165 {offsets = [2, 0], sizes = [1, 128], strides = [1, 1]} : vector<8x128xf32> to vector<1x128xf32>
      %194 = vector.broadcast %193 : vector<1x128xf32> to vector<16x128xf32>
      %195 = arith.addf %192, %194 : vector<16x128xf32>
      %c0_64 = arith.constant 0 : index
      %c0_65 = arith.constant 0 : index
      %196 = vector.load %arg10[%c0_64, %c0_65] : memref<16x128xf32, #tpu.memory_space<vmem>>, vector<16x128xf32>
      tpu.vector_store %arg10[%c0_64, %c0_65], %195 {strides = array<i32>} : memref<16x128xf32, #tpu.memory_space<vmem>>, vector<16x128xf32>,
    } else {
    }
    return
  }
  func.func @transform_0(%arg0: i32) -> (i32, i32) {
    %c0_i32 = arith.constant 0 : i32
    %c0_i32_0 = arith.constant 0 : i32
    %c0_i32_1 = arith.constant 0 : i32
    return %c0_i32, %c0_i32_0 : i32, i32
  }
  func.func @transform_1(%arg0: i32) -> (i32, i32) {
    %c0_i32 = arith.constant 0 : i32
    %c0_i32_0 = arith.constant 0 : i32
    %c0_i32_1 = arith.constant 0 : i32
    return %c0_i32, %c0_i32_0 : i32, i32
  }
  func.func @transform_2(%arg0: i32) -> (i32, i32, i32) {
    %c0_i32 = arith.constant 0 : i32
    %c0_i32_0 = arith.constant 0 : i32
    %c0_i32_1 = arith.constant 0 : i32
    return %arg0, %c0_i32, %c0_i32_0 : i32, i32, i32
  }
  func.func @transform_3(%arg0: i32) -> (i32, i32, i32) {
    %c0_i32 = arith.constant 0 : i32
    %c0_i32_0 = arith.constant 0 : i32
    %c0_i32_1 = arith.constant 0 : i32
    return %arg0, %c0_i32, %c0_i32_0 : i32, i32, i32
  }
  func.func @transform_4(%arg0: i32) -> (i32, i32, i32) {
    %c0_i32 = arith.constant 0 : i32
    %c0_i32_0 = arith.constant 0 : i32
    %c0_i32_1 = arith.constant 0 : i32
    return %arg0, %c0_i32, %c0_i32_0 : i32, i32, i32
  }
  func.func @transform_5(%arg0: i32) -> (i32, i32, i32) {
    %c0_i32 = arith.constant 0 : i32
    %c0_i32_0 = arith.constant 0 : i32
    %c0_i32_1 = arith.constant 0 : i32
    return %arg0, %c0_i32, %c0_i32_0 : i32, i32, i32
  }
  func.func @transform_6(%arg0: i32) -> (i32, i32, i32) {
    %c0_i32 = arith.constant 0 : i32
    %c0_i32_0 = arith.constant 0 : i32
    %c0_i32_1 = arith.constant 0 : i32
    return %arg0, %c0_i32, %c0_i32_0 : i32, i32, i32
  }
  func.func @transform_7(%arg0: i32) -> (i32, i32) {
    %c0_i32 = arith.constant 0 : i32
    %c0_i32_0 = arith.constant 0 : i32
    %c0_i32_1 = arith.constant 0 : i32
    return %c0_i32, %c0_i32_0 : i32, i32
  }
  func.func @transform_8(%arg0: i32) -> (i32, i32) {
    %c0_i32 = arith.constant 0 : i32
    %c0_i32_0 = arith.constant 0 : i32
    %c0_i32_1 = arith.constant 0 : i32
    return %c0_i32, %c0_i32_0 : i32, i32
  }
  func.func @transform_9(%arg0: i32) -> (i32, i32) {
    %c0_i32 = arith.constant 0 : i32
    %c0_i32_0 = arith.constant 0 : i32
    %c0_i32_1 = arith.constant 0 : i32
    return %c0_i32, %c0_i32_0 : i32, i32
  }
}

</mosaic_0001>

<llo_original>
// kernel: tpu_custom_call.1
$region0: #{tpu_custom_call.1}
  #allocation0 [shape = 'u32[]', space=smem, size = 0x4, offset = 0x4, fixed_abs, tag = 'smem constant byte address 0x4 - core index']
  #allocation1 [shape = 'u32[144,128]{1,0:T(1,128)}', space=vmem, size = 0x12000, scoped, tag = 'internal scratch']
  #allocation2 [shape = 'f32[16,32]{1,0:T(8,128)}', space=vmem, size = 0x2000, scoped, tag = 'scratch operand']
  %s0 = inlined_call_operand.vmem [shape: f32[16,32], index: 0, kind: input, shape index: {}]
  %s1 = inlined_call_operand.vmem [shape: f32[16,16], index: 1, kind: input, shape index: {}]
  %s2 = inlined_call_operand.vmem [shape: f32[2,8,128], index: 2, kind: input, shape index: {}]
  %s3 = inlined_call_operand.vmem [shape: bf16[2,32,96], index: 3, kind: input, shape index: {}]
  %s4 = inlined_call_operand.vmem [shape: bf16[2,32,32], index: 4, kind: input, shape index: {}]
  %s5 = inlined_call_operand.vmem [shape: bf16[2,32,128], index: 5, kind: input, shape index: {}]
  %s6 = inlined_call_operand.vmem [shape: bf16[2,128,32], index: 6, kind: input, shape index: {}]
  %s7 = inlined_call_operand.vmem [shape: bf16[32,128], index: 7, kind: input, shape index: {}]
  %s8 = inlined_call_operand.vmem [shape: f32[8,128], index: 8, kind: input, shape index: {}]
  %s9 = inlined_call_operand.hbm [shape: f32[16,128], index: 9, kind: output, shape index: {}]
  %s10 = sld [smem:[#allocation0]]
  $region77: #{tpu_custom_call.1} parent=0
    _
  %s12 = ssub.s32 1, %s10
  %s13 = scalar_select 0, %s12, %s10
  $region1: #{tpu_custom_call.1} parent=0
    #allocation3 [shape = 'u8[8192]{0}', space=vmem, size = 0x2000, scoped, tag = 'output window, operand 0, single buffered']
    #allocation4 [shape = 's32[2]{0}', space=sflag, size = 0x8, scoped, tag = 'scoped memory for tpu_custom_call.1']
    %14 = vsyncpa [#allocation4], 0
    loop: start=0, step=1, limit=4
    $region2: #{tpu_custom_call.1} parent=1 // loop_pre_header
      _
    $region3: #{tpu_custom_call.1} parent=1 // loop_header
      %s16 = sphi 0, %s20
      %p17 = scmp.ge.s32.totalorder %s16, 4
      %s24 = sphi 0, %s24
      %s26 = sphi 0, %s24
      %s27 = sphi 0, %s26
      %s41 = sphi 0, %s27
      %s45 = sphi 0, %s45
      %s47 = sphi 0, %s45
      %s48 = sphi 0, %s47
      %s62 = sphi 0, %s48
      %s68 = sphi 0, %s70
      %s71 = sphi 0, %s68
      %s72 = sphi 0, %s71
      %s88 = sphi 0, %s72
      %s94 = sphi 0, %s96
      %s97 = sphi 0, %s94
      %s98 = sphi 0, %s97
      %s114 = sphi 0, %s98
      %s120 = sphi 0, %s122
      %s123 = sphi 0, %s120
      %s124 = sphi 0, %s123
      %s140 = sphi 0, %s124
      %s146 = sphi 0, %s148
      %s149 = sphi 0, %s146
      %s150 = sphi 0, %s149
      %s166 = sphi 0, %s150
      %s172 = sphi 0, %s174
      %s175 = sphi 0, %s172
      %s176 = sphi 0, %s175
      %s192 = sphi 0, %s176
      %s196 = sphi 0, %s196
      %s198 = sphi 0, %s196
      %s199 = sphi 0, %s198
      %s213 = sphi 0, %s199
      %s217 = sphi 0, %s217
      %s219 = sphi 0, %s217
      %s220 = sphi 0, %s219
      %s234 = sphi 0, %s220
      %s238 = sphi 0, %s238
      %s240 = sphi 0, %s238
      %s241 = sphi 0, %s240
      %s255 = sphi 0, %s241
    $region4: #{tpu_custom_call.1} parent=1 // loop_header_branch
      %19 = sbr.rel (%p17) target = $region8
    $region5: #{tpu_custom_call.1} parent=1 // loop_body
      %s21 = ssub.s32 %s16, 1
      %s22 = ssub.s32 %s16, 2
      %s23 = sadd.s32 %s16, 1
      %s25 = sadd.s32 %s24, 1
      %p28 = scmp.eq.s32.totalorder %s16, 1
      %p29 = scmp.ne.s32.totalorder %s24, %s26
      %p30 = scmp.eq.s32.totalorder %s16, 0
      %p31 = por %p29, %p30
      %p32 = scmp.ne.s32.totalorder %s24, %s26
      %p33 = scmp.eq.s32.totalorder %s21, 1
      %p34 = por %p32, %p33
      %p35 = scmp.ne.s32.totalorder %s26, %s27
      %p36 = scmp.eq.s32.totalorder %s21, 0
      %p37 = por %p35, %p36
      %p38 = scmp.ne.s32.totalorder %s26, %s27
      %p39 = scmp.eq.s32.totalorder %s22, 1
      %p40 = por %p38, %p39
      %p42 = scmp.ne.s32.totalorder %s27, %s41
      %p43 = scmp.eq.s32.totalorder %s22, 0
      %p44 = por %p42, %p43
      %s46 = sadd.s32 %s45, 1
      %p49 = scmp.eq.s32.totalorder %s16, 1
      %p50 = scmp.ne.s32.totalorder %s45, %s47
      %p51 = scmp.eq.s32.totalorder %s16, 0
      %p52 = por %p50, %p51
      %p53 = scmp.ne.s32.totalorder %s45, %s47
      %p54 = scmp.eq.s32.totalorder %s21, 1
      %p55 = por %p53, %p54
      %p56 = scmp.ne.s32.totalorder %s47, %s48
      %p57 = scmp.eq.s32.totalorder %s21, 0
      %p58 = por %p56, %p57
      %p59 = scmp.ne.s32.totalorder %s47, %s48
      %p60 = scmp.eq.s32.totalorder %s22, 1
      %p61 = por %p59, %p60
      %p63 = scmp.ne.s32.totalorder %s48, %s62
      %p64 = scmp.eq.s32.totalorder %s22, 0
      %p65 = por %p63, %p64
      %s66 = ssub.s32 %s16, %s23
      %p67 = scmp.eq.s32.totalorder %s66, 0
      %s69 = sadd.s32 %s68, 1
      %s70 = scalar_select %p67, %s68, %s69
      %p73 = pneg %p67
      %p74 = scmp.eq.s32.totalorder %s16, 1
      %p75 = por %p73, %p74
      %p76 = scmp.ne.s32.totalorder %s68, %s71
      %p77 = scmp.eq.s32.totalorder %s16, 0
      %p78 = por %p76, %p77
      %p79 = scmp.ne.s32.totalorder %s68, %s71
      %p80 = scmp.eq.s32.totalorder %s21, 1
      %p81 = por %p79, %p80
      %p82 = scmp.ne.s32.totalorder %s71, %s72
      %p83 = scmp.eq.s32.totalorder %s21, 0
      %p84 = por %p82, %p83
      %p85 = scmp.ne.s32.totalorder %s71, %s72
      %p86 = scmp.eq.s32.totalorder %s22, 1
      %p87 = por %p85, %p86
      %p89 = scmp.ne.s32.totalorder %s72, %s88
      %p90 = scmp.eq.s32.totalorder %s22, 0
      %p91 = por %p89, %p90
      %s92 = ssub.s32 %s16, %s23
      %p93 = scmp.eq.s32.totalorder %s92, 0
      %s95 = sadd.s32 %s94, 1
      %s96 = scalar_select %p93, %s94, %s95
      %p99 = pneg %p93
      %p100 = scmp.eq.s32.totalorder %s16, 1
      %p101 = por %p99, %p100
      %p102 = scmp.ne.s32.totalorder %s94, %s97
      %p103 = scmp.eq.s32.totalorder %s16, 0
      %p104 = por %p102, %p103
      %p105 = scmp.ne.s32.totalorder %s94, %s97
      %p106 = scmp.eq.s32.totalorder %s21, 1
      %p107 = por %p105, %p106
      %p108 = scmp.ne.s32.totalorder %s97, %s98
      %p109 = scmp.eq.s32.totalorder %s21, 0
      %p110 = por %p108, %p109
      %p111 = scmp.ne.s32.totalorder %s97, %s98
      %p112 = scmp.eq.s32.totalorder %s22, 1
      %p113 = por %p111, %p112
      %p115 = scmp.ne.s32.totalorder %s98, %s114
      %p116 = scmp.eq.s32.totalorder %s22, 0
      %p117 = por %p115, %p116
      %s118 = ssub.s32 %s16, %s23
      %p119 = scmp.eq.s32.totalorder %s118, 0
      %s121 = sadd.s32 %s120, 1
      %s122 = scalar_select %p119, %s120, %s121
      %p125 = pneg %p119
      %p126 = scmp.eq.s32.totalorder %s16, 1
      %p127 = por %p125, %p126
      %p128 = scmp.ne.s32.totalorder %s120, %s123
      %p129 = scmp.eq.s32.totalorder %s16, 0
      %p130 = por %p128, %p129
      %p131 = scmp.ne.s32.totalorder %s120, %s123
      %p132 = scmp.eq.s32.totalorder %s21, 1
      %p133 = por %p131, %p132
      %p134 = scmp.ne.s32.totalorder %s123, %s124
      %p135 = scmp.eq.s32.totalorder %s21, 0
      %p136 = por %p134, %p135
      %p137 = scmp.ne.s32.totalorder %s123, %s124
      %p138 = scmp.eq.s32.totalorder %s22, 1
      %p139 = por %p137, %p138
      %p141 = scmp.ne.s32.totalorder %s124, %s140
      %p142 = scmp.eq.s32.totalorder %s22, 0
      %p143 = por %p141, %p142
      %s144 = ssub.s32 %s16, %s23
      %p145 = scmp.eq.s32.totalorder %s144, 0
      %s147 = sadd.s32 %s146, 1
      %s148 = scalar_select %p145, %s146, %s147
      %p151 = pneg %p145
      %p152 = scmp.eq.s32.totalorder %s16, 1
      %p153 = por %p151, %p152
      %p154 = scmp.ne.s32.totalorder %s146, %s149
      %p155 = scmp.eq.s32.totalorder %s16, 0
      %p156 = por %p154, %p155
      %p157 = scmp.ne.s32.totalorder %s146, %s149
      %p158 = scmp.eq.s32.totalorder %s21, 1
      %p159 = por %p157, %p158
      %p160 = scmp.ne.s32.totalorder %s149, %s150
      %p161 = scmp.eq.s32.totalorder %s21, 0
      %p162 = por %p160, %p161
      %p163 = scmp.ne.s32.totalorder %s149, %s150
      %p164 = scmp.eq.s32.totalorder %s22, 1
      %p165 = por %p163, %p164
      %p167 = scmp.ne.s32.totalorder %s150, %s166
      %p168 = scmp.eq.s32.totalorder %s22, 0
      %p169 = por %p167, %p168
      %s170 = ssub.s32 %s16, %s23
      %p171 = scmp.eq.s32.totalorder %s170, 0
      %s173 = sadd.s32 %s172, 1
      %s174 = scalar_select %p171, %s172, %s173
      %p177 = pneg %p171
      %p178 = scmp.eq.s32.totalorder %s16, 1
      %p179 = por %p177, %p178
      %p180 = scmp.ne.s32.totalorder %s172, %s175
      %p181 = scmp.eq.s32.totalorder %s16, 0
      %p182 = por %p180, %p181
      %p183 = scmp.ne.s32.totalorder %s172, %s175
      %p184 = scmp.eq.s32.totalorder %s21, 1
      %p185 = por %p183, %p184
      %p186 = scmp.ne.s32.totalorder %s175, %s176
      %p187 = scmp.eq.s32.totalorder %s21, 0
      %p188 = por %p186, %p187
      %p189 = scmp.ne.s32.totalorder %s175, %s176
      %p190 = scmp.eq.s32.totalorder %s22, 1
      %p191 = por %p189, %p190
      %p193 = scmp.ne.s32.totalorder %s176, %s192
      %p194 = scmp.eq.s32.totalorder %s22, 0
      %p195 = por %p193, %p194
      %s197 = sadd.s32 %s196, 1
      %p200 = scmp.eq.s32.totalorder %s16, 1
      %p201 = scmp.ne.s32.totalorder %s196, %s198
      %p202 = scmp.eq.s32.totalorder %s16, 0
      %p203 = por %p201, %p202
      %p204 = scmp.ne.s32.totalorder %s196, %s198
      %p205 = scmp.eq.s32.totalorder %s21, 1
      %p206 = por %p204, %p205
      %p207 = scmp.ne.s32.totalorder %s198, %s199
      %p208 = scmp.eq.s32.totalorder %s21, 0
      %p209 = por %p207, %p208
      %p210 = scmp.ne.s32.totalorder %s198, %s199
      %p211 = scmp.eq.s32.totalorder %s22, 1
      %p212 = por %p210, %p211
      %p214 = scmp.ne.s32.totalorder %s199, %s213
      %p215 = scmp.eq.s32.totalorder %s22, 0
      %p216 = por %p214, %p215
      %s218 = sadd.s32 %s217, 1
      %p221 = scmp.eq.s32.totalorder %s16, 1
      %p222 = scmp.ne.s32.totalorder %s217, %s219
      %p223 = scmp.eq.s32.totalorder %s16, 0
      %p224 = por %p222, %p223
      %p225 = scmp.ne.s32.totalorder %s217, %s219
      %p226 = scmp.eq.s32.totalorder %s21, 1
      %p227 = por %p225, %p226
      %p228 = scmp.ne.s32.totalorder %s219, %s220
      %p229 = scmp.eq.s32.totalorder %s21, 0
      %p230 = por %p228, %p229
      %p231 = scmp.ne.s32.totalorder %s219, %s220
      %p232 = scmp.eq.s32.totalorder %s22, 1
      %p233 = por %p231, %p232
      %p235 = scmp.ne.s32.totalorder %s220, %s234
      %p236 = scmp.eq.s32.totalorder %s22, 0
      %p237 = por %p235, %p236
      %s239 = sadd.s32 %s238, 1
      %p242 = scmp.eq.s32.totalorder %s16, 1
      %p243 = scmp.ne.s32.totalorder %s238, %s240
      %p244 = scmp.eq.s32.totalorder %s16, 0
      %p245 = por %p243, %p244
      %p246 = scmp.ne.s32.totalorder %s238, %s240
      %p247 = scmp.eq.s32.totalorder %s21, 1
      %p248 = por %p246, %p247
      %p249 = scmp.ne.s32.totalorder %s240, %s241
      %p250 = scmp.eq.s32.totalorder %s21, 0
      %p251 = por %p249, %p250
      %p252 = scmp.ne.s32.totalorder %s240, %s241
      %p253 = scmp.eq.s32.totalorder %s22, 1
      %p254 = por %p252, %p253
      %p256 = scmp.ne.s32.totalorder %s241, %s255
      %p257 = scmp.eq.s32.totalorder %s22, 0
      %p258 = por %p256, %p257
      %p259 = scmp.le.s32.totalorder 1, %s16
      %p260 = scmp.lt.s32.totalorder %s16, 3
      %p261 = pnand %p259, %p260
      %p262 = pneg %p261
      // Predicated region
      $region9: #{tpu_custom_call.1} parent=5 // pred_check
        _
      $region10: #{tpu_custom_call.1} parent=5 // pred_check_branch
        %264 = sbr.rel (%p261) target = $region12
      $region11: #{tpu_custom_call.1} parent=5 // pred_region
        %s265 = ssub.s32 %s16, 1
        // Predicated region
        $region13: #{tpu_custom_call.1} parent=11 // pred_check
          %p266 = pneg %p37
        $region14: #{tpu_custom_call.1} parent=11 // pred_check_branch
          %268 = sbr.rel (%p266) target = $region16
        $region15: #{tpu_custom_call.1} parent=11 // pred_region
          _
        $region16: #{tpu_custom_call.1} parent=11 // pred_fallthru
          _
        // Predicated region
        $region17: #{tpu_custom_call.1} parent=11 // pred_check
          %p269 = pneg %p58
        $region18: #{tpu_custom_call.1} parent=11 // pred_check_branch
          %271 = sbr.rel (%p269) target = $region20
        $region19: #{tpu_custom_call.1} parent=11 // pred_region
          _
        $region20: #{tpu_custom_call.1} parent=11 // pred_fallthru
          _
        // Predicated region
        $region21: #{tpu_custom_call.1} parent=11 // pred_check
          %p272 = pneg %p209
        $region22: #{tpu_custom_call.1} parent=11 // pred_check_branch
          %274 = sbr.rel (%p272) target = $region24
        $region23: #{tpu_custom_call.1} parent=11 // pred_region
          _
        $region24: #{tpu_custom_call.1} parent=11 // pred_fallthru
          _
        // Predicated region
        $region25: #{tpu_custom_call.1} parent=11 // pred_check
          %p275 = pneg %p230
        $region26: #{tpu_custom_call.1} parent=11 // pred_check_branch
          %277 = sbr.rel (%p275) target = $region28
        $region27: #{tpu_custom_call.1} parent=11 // pred_region
          _
        $region28: #{tpu_custom_call.1} parent=11 // pred_fallthru
          _
      $region12: #{tpu_custom_call.1} parent=5 // pred_fallthru
        _
      %p278 = scmp.lt.s32.totalorder %s16, 2
      // Predicated region
      $region29: #{tpu_custom_call.1} parent=5 // pred_check
        %p279 = pneg %p278
      $region30: #{tpu_custom_call.1} parent=5 // pred_check_branch
        %281 = sbr.rel (%p279) target = $region32
      $region31: #{tpu_custom_call.1} parent=5 // pred_region
        // Predicated region
        $region33: #{tpu_custom_call.1} parent=31 // pred_check
          %p282 = pneg %p78
        $region34: #{tpu_custom_call.1} parent=31 // pred_check_branch
          %284 = sbr.rel (%p282) target = $region36
        $region35: #{tpu_custom_call.1} parent=31 // pred_region
          %p285 = scmp.lt.s32.totalorder %s16, 1
          %s286 = scalar_select %p285, %s16, 1
          %s287 = smul.addr %s286, 8
          %s288 = scalar_lea.vmem %s2, %s287
        $region36: #{tpu_custom_call.1} parent=31 // pred_fallthru
          _
        // Predicated region
        $region37: #{tpu_custom_call.1} parent=31 // pred_check
          %p289 = pneg %p104
        $region38: #{tpu_custom_call.1} parent=31 // pred_check_branch
          %291 = sbr.rel (%p289) target = $region40
        $region39: #{tpu_custom_call.1} parent=31 // pred_region
          %p292 = scmp.lt.s32.totalorder %s16, 1
          %s293 = scalar_select %p292, %s16, 1
          %s294 = smul.addr %s293, 4
          %s295 = smul.addr %s294, 4
          %s296 = scalar_lea.vmem %s3, %s295
        $region40: #{tpu_custom_call.1} parent=31 // pred_fallthru
          _
        // Predicated region
        $region41: #{tpu_custom_call.1} parent=31 // pred_check
          %p297 = pneg %p130
        $region42: #{tpu_custom_call.1} parent=31 // pred_check_branch
          %299 = sbr.rel (%p297) target = $region44
        $region43: #{tpu_custom_call.1} parent=31 // pred_region
          %p300 = scmp.lt.s32.totalorder %s16, 1
          %s301 = scalar_select %p300, %s16, 1
          %s302 = smul.addr %s301, 4
          %s303 = smul.addr %s302, 4
          %s304 = scalar_lea.vmem %s4, %s303
        $region44: #{tpu_custom_call.1} parent=31 // pred_fallthru
          _
        // Predicated region
        $region45: #{tpu_custom_call.1} parent=31 // pred_check
          %p305 = pneg %p156
        $region46: #{tpu_custom_call.1} parent=31 // pred_check_branch
          %307 = sbr.rel (%p305) target = $region48
        $region47: #{tpu_custom_call.1} parent=31 // pred_region
          %p308 = scmp.lt.s32.totalorder %s16, 1
          %s309 = scalar_select %p308, %s16, 1
          %s310 = smul.addr %s309, 4
          %s311 = smul.addr %s310, 4
          %s312 = scalar_lea.vmem %s5, %s311
        $region48: #{tpu_custom_call.1} parent=31 // pred_fallthru
          _
        // Predicated region
        $region49: #{tpu_custom_call.1} parent=31 // pred_check
          %p313 = pneg %p182
        $region50: #{tpu_custom_call.1} parent=31 // pred_check_branch
          %315 = sbr.rel (%p313) target = $region52
        $region51: #{tpu_custom_call.1} parent=31 // pred_region
          %p316 = scmp.lt.s32.totalorder %s16, 1
          %s317 = scalar_select %p316, %s16, 1
          %s318 = smul.addr %s317, 16
          %s319 = smul.addr %s318, 4
          %s320 = scalar_lea.vmem %s6, %s319
        $region52: #{tpu_custom_call.1} parent=31 // pred_fallthru
          _
      $region32: #{tpu_custom_call.1} parent=5 // pred_fallthru
        _
      %p321 = scmp.le.s32.totalorder 1, %s16
      %p322 = scmp.lt.s32.totalorder %s16, 3
      %p323 = pnand %p321, %p322
      %p324 = pneg %p323
      // Predicated region
      $region53: #{tpu_custom_call.1} parent=5 // pred_check
        _
      $region54: #{tpu_custom_call.1} parent=5 // pred_check_branch
        %326 = sbr.rel (%p323) target = $region56
      $region55: #{tpu_custom_call.1} parent=5 // pred_region
        %s327 = ssub.s32 %s16, 1
        %p328 = pneg %p37
        %p329 = pneg %p34
        %p330 = pneg %p58
        %p331 = pneg %p55
        %p332 = scmp.lt.s32.totalorder %s21, 1
        %s333 = scalar_select %p332, %s21, 1
        %s334 = smul.addr %s333, 8
        %s335 = scalar_lea.vmem %s2, %s334
        %p336 = pneg %p84
        %p337 = pneg %p81
        %p338 = scmp.lt.s32.totalorder %s21, 1
        %s339 = scalar_select %p338, %s21, 1
        %s340 = smul.addr %s339, 4
        %s341 = smul.addr %s340, 4
        %s342 = scalar_lea.vmem %s3, %s341
        %p343 = pneg %p110
        %p344 = pneg %p107
        %p345 = scmp.lt.s32.totalorder %s21, 1
        %s346 = scalar_select %p345, %s21, 1
        %s347 = smul.addr %s346, 4
        %s348 = smul.addr %s347, 4
        %s349 = scalar_lea.vmem %s4, %s348
        %p350 = pneg %p136
        %p351 = pneg %p133
        %p352 = scmp.lt.s32.totalorder %s21, 1
        %s353 = scalar_select %p352, %s21, 1
        %s354 = smul.addr %s353, 4
        %s355 = smul.addr %s354, 4
        %s356 = scalar_lea.vmem %s5, %s355
        %p357 = pneg %p162
        %p358 = pneg %p159
        %p359 = scmp.lt.s32.totalorder %s21, 1
        %s360 = scalar_select %p359, %s21, 1
        %s361 = smul.addr %s360, 16
        %s362 = smul.addr %s361, 4
        %s363 = scalar_lea.vmem %s6, %s362
        %p364 = pneg %p188
        %p365 = pneg %p185
        %p366 = pneg %p209
        %p367 = pneg %p206
        %p368 = pneg %p230
        %p369 = pneg %p227
        %p370 = pneg %p251
        %p371 = pneg %p248
        %p372 = scmp.lt.s32.totalorder %s21, 1
        %s373 = scalar_select %p372, %s21, 1
        %s374 = smul.addr %s373, 8
        %s375 = scalar_lea.vmem %s2, %s374
        %p376 = scmp.lt.s32.totalorder %s21, 1
        %s377 = scalar_select %p376, %s21, 1
        %s378 = smul.addr %s377, 4
        %s379 = smul.addr %s378, 4
        %s380 = scalar_lea.vmem %s3, %s379
        %p381 = scmp.lt.s32.totalorder %s21, 1
        %s382 = scalar_select %p381, %s21, 1
        %s383 = smul.addr %s382, 4
        %s384 = smul.addr %s383, 4
        %s385 = scalar_lea.vmem %s4, %s384
        %p386 = scmp.lt.s32.totalorder %s21, 1
        %s387 = scalar_select %p386, %s21, 1
        %s388 = smul.addr %s387, 4
        %s389 = smul.addr %s388, 4
        %s390 = scalar_lea.vmem %s5, %s389
        %p391 = scmp.lt.s32.totalorder %s21, 1
        %s392 = scalar_select %p391, %s21, 1
        %s393 = smul.addr %s392, 16
        %s394 = smul.addr %s393, 4
        %s395 = scalar_lea.vmem %s6, %s394
        %p397 = scmp.eq.s32.totalorder %s21, 0
        // Predicated region
        $region57: #{tpu_custom_call.1} parent=55 // pred_check
          %p398 = pneg %p397
        $region58: #{tpu_custom_call.1} parent=55 // pred_check_branch
          %400 = sbr.rel (%p398) target = $region60
        $region59: #{tpu_custom_call.1} parent=55 // pred_region
          %v401 = vld [vmem:[%s0] sm:$0xff]
          %v402 = vld [vmem:[%s0 + $0x8] sm:$0xff]
          %vm403 = vcmask 261120
          %404 = vst.msk [vmem:[#allocation2] sm:$0xff] %vm403, %v401
          %405 = vst.msk [vmem:[#allocation2 + $0x8] sm:$0xff] %vm403, %v402
        $region60: #{tpu_custom_call.1} parent=55 // pred_fallthru
          _
        %v406 = vld [vmem:[#allocation2] sm:$0xff]
        %v407 = vld [vmem:[#allocation2 + $0x8] sm:$0xff]
        %v408 = vld [vmem:[%s375] sm:$0xff]
        %v409 = vld [vmem:[%s1] sm:$0xff]
        %v410 = vld [vmem:[%s1 + $0x8] sm:$0xff]
        %vm411 = vcmask 261120
        %v412 = vsel %vm411, %v406, 0.0
        %413 = vadd.xlane.f32.xlu0 %v412
        %v414 = vpop.xlane.xlu0 %413
        %v415 = vsel %vm411, %v407, 0.0
        %416 = vadd.xlane.f32.xlu0 %v415
        %v417 = vpop.xlane.xlu0 %416
        %v418 = vrcp.pop 32.0
        %v419 = vmul.f32 %v414, %v418
        %v420 = vmul.f32 %v417, %v418
        %v421 = vsub.f32 %v406, %v419
        %v422 = vsub.f32 %v407, %v420
        %v423 = vmul.f32 %v421, %v421
        %v424 = vmul.f32 %v422, %v422
        %v425 = vsel %vm411, %v423, 0.0
        %426 = vadd.xlane.f32.xlu0 %v425
        %v427 = vpop.xlane.xlu0 %426
        %v428 = vsel %vm411, %v424, 0.0
        %429 = vadd.xlane.f32.xlu0 %v428
        %v430 = vpop.xlane.xlu0 %429
        %v431 = vmul.f32 %v427, %v418
        %v432 = vmul.f32 %v430, %v418
        %v433 = vadd.f32 %v431, 1e-05
        %v434 = vadd.f32 %v432, 1e-05
        %v435 = vrsqrt.pop %v433
        %v436 = vrsqrt.pop %v434
        %v437 = vmul.f32 %v421, %v435
        %v438 = vmul.f32 %v422, %v436
        %v439 = vlaneseq
        %v440 = vshrl.u32 %v439, 7
        %v441 = vsub.s32 0, %v440
        %v442 = vrot.slane %v408, %v441
        %v443 = vmul.f32 %v437, %v442
        %v444 = vmul.f32 %v438, %v442
        %v445 = vlaneseq
        %v446 = vshrl.u32 %v445, 7
        %v447 = vsub.s32 1, %v446
        %v448 = vrot.slane %v408, %v447
        %v449 = vadd.f32 %v443, %v448
        %v450 = vadd.f32 %v444, %v448
        %v451 = vpack.c.bf16 %v450, %v449
        %v452 = vld [vmem:[%s380] sm:$0xf]
        %v453 = vld [vmem:[%s380 + $0x4] sm:$0xf]
        %v454 = vld [vmem:[%s380 + $0x8] sm:$0xf]
        %v455 = vld [vmem:[%s380 + $0xc] sm:$0xf]
        %v460 = vunpack.c.l.b16 %v452
        %v461 = vunpack.c.l.b16 %v453
        %v462 = vunpack.c.l.b16 %v454
        %v463 = vunpack.c.l.b16 %v455
        %v464 = vpack.c.b16 %v461, %v460
        %v465 = vpack.c.b16 %v463, %v462
        %v469 = vsel %vm411, %v451, 0
        %471 = vmatprep.subr.bf16.mxu0 0
        %472 = vmatpush1.bf16.msra.mxu0 %v464
        %473 = vmatprep.subr.bf16.mxu0 0
        %474 = vmatpush1.bf16.msra.mxu0 %v465
        %475 = vmatprep.subr.bf16.mxu0 0
        %476 = vmatpush1.bf16.msra.mxu0 0
        %477 = vmatprep.subr.bf16.mxu0 0
        %478 = vmatpush1.bf16.msra.mxu0 0
        %479 = vmatprep.subr.bf16.mxu0 0
        %480 = vmatpush1.bf16.msra.mxu0 0
        %481 = vmatprep.subr.bf16.mxu0 0
        %482 = vmatpush1.bf16.msra.mxu0 0
        %483 = vmatprep.subr.bf16.mxu0 0
        %484 = vmatpush1.bf16.msra.mxu0 0
        %485 = vmatprep.subr.bf16.mxu0 0
        %486 = vmatpush1.bf16.msra.mxu0 0
        %487 = vmatprep.subr.bf16.mxu0 0
        %488 = vmatpush1.bf16.msra.mxu0 0
        %489 = vmatprep.subr.bf16.mxu0 0
        %490 = vmatpush1.bf16.msra.mxu0 0
        %491 = vmatprep.subr.bf16.mxu0 0
        %492 = vmatpush1.bf16.msra.mxu0 0
        %493 = vmatprep.subr.bf16.mxu0 0
        %494 = vmatpush1.bf16.msra.mxu0 0
        %495 = vmatprep.subr.bf16.mxu0 0
        %496 = vmatpush1.bf16.msra.mxu0 0
        %497 = vmatprep.subr.bf16.mxu0 0
        %498 = vmatpush1.bf16.msra.mxu0 0
        %499 = vmatprep.subr.bf16.mxu0 0
        %500 = vmatpush1.bf16.msra.mxu0 0
        %501 = vmatprep.subr.bf16.mxu0 0
        %502 = vmatpush1.bf16.msra.mxu0 0
        %503 = vmatprep.mubr.bf16.mxu0 0
        %504 = vmatmul.mubr.bf16.gmra.mrb[0].mxu0 %v469
        %v505 = vpop.f32.mrb[0].mxu0
        %v506 = vadd.f32 0.0, %v505
        %v507 = vpop.f32.mrb[0].mxu0
        %v508 = vpop.f32.mrb[0].mxu0
        %v509 = vadd.f32 0.0, %v508
        %v510 = vpop.f32.mrb[0].mxu0
        %511 = vdwg.mxu0
        %514 = vrot.lane.b32.xlu0 %v506, 96
        %v515 = vpop.permute.xlu0 %514
        %516 = vrot.lane.b32.xlu0 %v509, 96
        %v517 = vpop.permute.xlu0 %516
        %vm518 = vcmask 64512
        %v519 = vsel %vm518, %v506, 0
        %v521 = vsel %vm518, %v509, 0
        %v523 = vsel %vm518, %v515, 0
        %v525 = vsel %vm518, %v517, 0
        %527 = vmatprep.subr.mxu0 0.0
        %528 = vmatpush1.xpose.msra.mxu0 %v523
        %529 = vmatprep.subr.mxu0 0.0
        %530 = vmatpush1.xpose.msra.mxu0 %v525
        %531 = vmatprep.subr.mxu0 0.0
        %532 = vmatpush1.xpose.msra.mxu0 0.0
        %533 = vmatprep.subr.mxu0 0.0
        %534 = vmatpush1.xpose.msra.mxu0 0.0
        %535 = vmatprep.subr.mxu0 0.0
        %536 = vmatpush1.xpose.msra.mxu0 0.0
        %537 = vmatprep.subr.mxu0 0.0
        %538 = vmatpush1.xpose.msra.mxu0 0.0
        %539 = vmatprep.subr.mxu0 0.0
        %540 = vmatpush1.xpose.msra.mxu0 0.0
        %541 = vmatprep.subr.mxu0 0.0
        %542 = vmatpush1.xpose.msra.mxu0 0.0
        %543 = vmatprep.subr.mxu0 0.0
        %544 = vmatpush1.xpose.msra.mxu0 0.0
        %545 = vmatprep.subr.mxu0 0.0
        %546 = vmatpush1.xpose.msra.mxu0 0.0
        %547 = vmatprep.subr.mxu0 0.0
        %548 = vmatpush1.xpose.msra.mxu0 0.0
        %549 = vmatprep.subr.mxu0 0.0
        %550 = vmatpush1.xpose.msra.mxu0 0.0
        %551 = vmatprep.subr.mxu0 0.0
        %552 = vmatpush1.xpose.msra.mxu0 0.0
        %553 = vmatprep.subr.mxu0 0.0
        %554 = vmatpush1.xpose.msra.mxu0 0.0
        %555 = vmatprep.subr.mxu0 0.0
        %556 = vmatpush1.xpose.msra.mxu0 0.0
        %557 = vmatprep.subr.mxu0 0.0
        %558 = vmatpush1.xpose.msra.mxu0 0.0
        %559 = vmatprep.subr.mxu0 0.0
        %560 = vmatpush1.xpose.msra.mxu0 0.0
        %561 = vmatprep.subr.mxu0 0.0
        %562 = vmatpush1.xpose.msra.mxu0 0.0
        %563 = vmatprep.subr.mxu0 0.0
        %564 = vmatpush1.xpose.msra.mxu0 0.0
        %565 = vmatprep.subr.mxu0 0.0
        %566 = vmatpush1.xpose.msra.mxu0 0.0
        %567 = vmatprep.subr.mxu0 0.0
        %568 = vmatpush1.xpose.msra.mxu0 0.0
        %569 = vmatprep.subr.mxu0 0.0
        %570 = vmatpush1.xpose.msra.mxu0 0.0
        %571 = vmatprep.subr.mxu0 0.0
        %572 = vmatpush1.xpose.msra.mxu0 0.0
        %573 = vmatprep.subr.mxu0 0.0
        %574 = vmatpush1.xpose.msra.mxu0 0.0
        %575 = vmatprep.subr.mxu0 0.0
        %576 = vmatpush1.xpose.msra.mxu0 0.0
        %577 = vmatprep.subr.mxu0 0.0
        %578 = vmatpush1.xpose.msra.mxu0 0.0
        %579 = vmatprep.subr.mxu0 0.0
        %580 = vmatpush1.xpose.msra.mxu0 0.0
        %581 = vmatprep.subr.mxu0 0.0
        %582 = vmatpush1.xpose.msra.mxu0 0.0
        %583 = vmatprep.subr.mxu0 0.0
        %584 = vmatpush1.xpose.msra.mxu0 0.0
        %585 = vmatprep.subr.mxu0 0.0
        %586 = vmatpush1.xpose.msra.mxu0 0.0
        %587 = vmatprep.subr.mxu0 0.0
        %588 = vmatpush1.xpose.msra.mxu0 0.0
        %589 = vmatprep.subr.mxu0 0.0
        %590 = vmatpush1.xpose.msra.mxu0 0.0
        %591 = vmatprep.mubr.f32.mxu0 0.0
        %592 = vmatmul.mubr.f32.gmra.mrb[0].mxu0 %v519
        %v593 = vpop.f32.mrb[0].mxu0
        %v594 = vadd.f32 0.0, %v593
        %v595 = vpop.f32.mrb[0].mxu0
        %596 = vmatprep.mubr.f32.mxu0 0.0
        %597 = vmatmul.mubr.f32.gmra.mrb[0].mxu0 %v521
        %v598 = vpop.f32.mrb[0].mxu0
        %v599 = vadd.f32 0.0, %v598
        %v600 = vpop.f32.mrb[0].mxu0
        %601 = vdwg.mxu0
        %v602 = vmul.f32 %v594, 0.17677669
        %v603 = vmul.f32 %v599, 0.17677669
        %v604 = vadd.f32 %v602, %v409
        %v605 = vadd.f32 %v603, %v410
        %vm606 = vcmask 130048
        %v607 = vsel %vm606, %v604, -inf
        %608 = vmax.xlane.f32.xlu0 %v607
        %v609 = vpop.xlane.xlu0 %608
        %v610 = vsel %vm606, %v605, -inf
        %611 = vmax.xlane.f32.xlu0 %v610
        %v612 = vpop.xlane.xlu0 %611
        %v613 = vsub.f32 %v604, %v609
        %v614 = vsub.f32 %v605, %v612
        %v615 = vmul.f32 %v613, 1.442695
        %v616 = vpow.pop %v615
        %v617 = vmul.f32 %v614, 1.442695
        %v618 = vpow.pop %v617
        %v619 = vsel %vm606, %v616, 0.0
        %620 = vadd.xlane.f32.xlu0 %v619
        %v621 = vpop.xlane.xlu0 %620
        %v622 = vsel %vm606, %v618, 0.0
        %623 = vadd.xlane.f32.xlu0 %v622
        %v624 = vpop.xlane.xlu0 %623
        %v625 = vrcp.pop %v621
        %v626 = vrcp.pop %v624
        %v627 = vmul.f32 %v616, %v625
        %v628 = vmul.f32 %v618, %v626
        %629 = vrot.lane.b32.xlu0 %v506, 64
        %v630 = vpop.permute.xlu0 %629
        %631 = vrot.lane.b32.xlu0 %v509, 64
        %v632 = vpop.permute.xlu0 %631
        %v636 = vsel %vm606, %v627, 0
        %v639 = vsel %vm606, %v628, 0
        %641 = vmatprep.subr.mxu0 0.0
        %642 = vmatpush1.msra.mxu0 %v630
        %643 = vmatprep.subr.mxu0 0.0
        %644 = vmatpush1.msra.mxu0 %v632
        %645 = vmatprep.subr.mxu0 0.0
        %646 = vmatpush1.msra.mxu0 0.0
        %647 = vmatprep.subr.mxu0 0.0
        %648 = vmatpush1.msra.mxu0 0.0
        %649 = vmatprep.subr.mxu0 0.0
        %650 = vmatpush1.msra.mxu0 0.0
        %651 = vmatprep.subr.mxu0 0.0
        %652 = vmatpush1.msra.mxu0 0.0
        %653 = vmatprep.subr.mxu0 0.0
        %654 = vmatpush1.msra.mxu0 0.0
        %655 = vmatprep.subr.mxu0 0.0
        %656 = vmatpush1.msra.mxu0 0.0
        %657 = vmatprep.subr.mxu0 0.0
        %658 = vmatpush1.msra.mxu0 0.0
        %659 = vmatprep.subr.mxu0 0.0
        %660 = vmatpush1.msra.mxu0 0.0
        %661 = vmatprep.subr.mxu0 0.0
        %662 = vmatpush1.msra.mxu0 0.0
        %663 = vmatprep.subr.mxu0 0.0
        %664 = vmatpush1.msra.mxu0 0.0
        %665 = vmatprep.subr.mxu0 0.0
        %666 = vmatpush1.msra.mxu0 0.0
        %667 = vmatprep.subr.mxu0 0.0
        %668 = vmatpush1.msra.mxu0 0.0
        %669 = vmatprep.subr.mxu0 0.0
        %670 = vmatpush1.msra.mxu0 0.0
        %671 = vmatprep.subr.mxu0 0.0
        %672 = vmatpush1.msra.mxu0 0.0
        %673 = vmatprep.subr.mxu0 0.0
        %674 = vmatpush1.msra.mxu0 0.0
        %675 = vmatprep.subr.mxu0 0.0
        %676 = vmatpush1.msra.mxu0 0.0
        %677 = vmatprep.subr.mxu0 0.0
        %678 = vmatpush1.msra.mxu0 0.0
        %679 = vmatprep.subr.mxu0 0.0
        %680 = vmatpush1.msra.mxu0 0.0
        %681 = vmatprep.subr.mxu0 0.0
        %682 = vmatpush1.msra.mxu0 0.0
        %683 = vmatprep.subr.mxu0 0.0
        %684 = vmatpush1.msra.mxu0 0.0
        %685 = vmatprep.subr.mxu0 0.0
        %686 = vmatpush1.msra.mxu0 0.0
        %687 = vmatprep.subr.mxu0 0.0
        %688 = vmatpush1.msra.mxu0 0.0
        %689 = vmatprep.subr.mxu0 0.0
        %690 = vmatpush1.msra.mxu0 0.0
        %691 = vmatprep.subr.mxu0 0.0
        %692 = vmatpush1.msra.mxu0 0.0
        %693 = vmatprep.subr.mxu0 0.0
        %694 = vmatpush1.msra.mxu0 0.0
        %695 = vmatprep.subr.mxu0 0.0
        %696 = vmatpush1.msra.mxu0 0.0
        %697 = vmatprep.subr.mxu0 0.0
        %698 = vmatpush1.msra.mxu0 0.0
        %699 = vmatprep.subr.mxu0 0.0
        %700 = vmatpush1.msra.mxu0 0.0
        %701 = vmatprep.subr.mxu0 0.0
        %702 = vmatpush1.msra.mxu0 0.0
        %703 = vmatprep.subr.mxu0 0.0
        %704 = vmatpush1.msra.mxu0 0.0
        %705 = vmatprep.mubr.f32.mxu0 0.0
        %706 = vmatmul.mubr.f32.gmra.mrb[0].mxu0 %v636
        %v707 = vpop.f32.mrb[0].mxu0
        %v708 = vadd.f32 0.0, %v707
        %v709 = vpop.f32.mrb[0].mxu0
        %710 = vmatprep.mubr.f32.mxu0 0.0
        %711 = vmatmul.mubr.f32.gmra.mrb[0].mxu0 %v639
        %v712 = vpop.f32.mrb[0].mxu0
        %v713 = vadd.f32 0.0, %v712
        %v714 = vpop.f32.mrb[0].mxu0
        %715 = vdwg.mxu0
        %716 = vrot.lane.b32.xlu0 %v506, 120
        %v717 = vpop.permute.xlu0 %716
        %718 = vrot.lane.b32.xlu0 %v509, 120
        %v719 = vpop.permute.xlu0 %718
        %720 = vrot.lane.b32.xlu0 %v506, 88
        %v721 = vpop.permute.xlu0 %720
        %722 = vrot.lane.b32.xlu0 %v509, 88
        %v723 = vpop.permute.xlu0 %722
        %v724 = vsel %vm518, %v717, 0
        %v726 = vsel %vm518, %v719, 0
        %v728 = vsel %vm518, %v721, 0
        %v730 = vsel %vm518, %v723, 0
        %732 = vmatprep.subr.mxu0 0.0
        %733 = vmatpush1.xpose.msra.mxu0 %v728
        %734 = vmatprep.subr.mxu0 0.0
        %735 = vmatpush1.xpose.msra.mxu0 %v730
        %736 = vmatprep.subr.mxu0 0.0
        %737 = vmatpush1.xpose.msra.mxu0 0.0
        %738 = vmatprep.subr.mxu0 0.0
        %739 = vmatpush1.xpose.msra.mxu0 0.0
        %740 = vmatprep.subr.mxu0 0.0
        %741 = vmatpush1.xpose.msra.mxu0 0.0
        %742 = vmatprep.subr.mxu0 0.0
        %743 = vmatpush1.xpose.msra.mxu0 0.0
        %744 = vmatprep.subr.mxu0 0.0
        %745 = vmatpush1.xpose.msra.mxu0 0.0
        %746 = vmatprep.subr.mxu0 0.0
        %747 = vmatpush1.xpose.msra.mxu0 0.0
        %748 = vmatprep.subr.mxu0 0.0
        %749 = vmatpush1.xpose.msra.mxu0 0.0
        %750 = vmatprep.subr.mxu0 0.0
        %751 = vmatpush1.xpose.msra.mxu0 0.0
        %752 = vmatprep.subr.mxu0 0.0
        %753 = vmatpush1.xpose.msra.mxu0 0.0
        %754 = vmatprep.subr.mxu0 0.0
        %755 = vmatpush1.xpose.msra.mxu0 0.0
        %756 = vmatprep.subr.mxu0 0.0
        %757 = vmatpush1.xpose.msra.mxu0 0.0
        %758 = vmatprep.subr.mxu0 0.0
        %759 = vmatpush1.xpose.msra.mxu0 0.0
        %760 = vmatprep.subr.mxu0 0.0
        %761 = vmatpush1.xpose.msra.mxu0 0.0
        %762 = vmatprep.subr.mxu0 0.0
        %763 = vmatpush1.xpose.msra.mxu0 0.0
        %764 = vmatprep.subr.mxu0 0.0
        %765 = vmatpush1.xpose.msra.mxu0 0.0
        %766 = vmatprep.subr.mxu0 0.0
        %767 = vmatpush1.xpose.msra.mxu0 0.0
        %768 = vmatprep.subr.mxu0 0.0
        %769 = vmatpush1.xpose.msra.mxu0 0.0
        %770 = vmatprep.subr.mxu0 0.0
        %771 = vmatpush1.xpose.msra.mxu0 0.0
        %772 = vmatprep.subr.mxu0 0.0
        %773 = vmatpush1.xpose.msra.mxu0 0.0
        %774 = vmatprep.subr.mxu0 0.0
        %775 = vmatpush1.xpose.msra.mxu0 0.0
        %776 = vmatprep.subr.mxu0 0.0
        %777 = vmatpush1.xpose.msra.mxu0 0.0
        %778 = vmatprep.subr.mxu0 0.0
        %779 = vmatpush1.xpose.msra.mxu0 0.0
        %780 = vmatprep.subr.mxu0 0.0
        %781 = vmatpush1.xpose.msra.mxu0 0.0
        %782 = vmatprep.subr.mxu0 0.0
        %783 = vmatpush1.xpose.msra.mxu0 0.0
        %784 = vmatprep.subr.mxu0 0.0
        %785 = vmatpush1.xpose.msra.mxu0 0.0
        %786 = vmatprep.subr.mxu0 0.0
        %787 = vmatpush1.xpose.msra.mxu0 0.0
        %788 = vmatprep.subr.mxu0 0.0
        %789 = vmatpush1.xpose.msra.mxu0 0.0
        %790 = vmatprep.subr.mxu0 0.0
        %791 = vmatpush1.xpose.msra.mxu0 0.0
        %792 = vmatprep.subr.mxu0 0.0
        %793 = vmatpush1.xpose.msra.mxu0 0.0
        %794 = vmatprep.subr.mxu0 0.0
        %795 = vmatpush1.xpose.msra.mxu0 0.0
        %796 = vmatprep.mubr.f32.mxu0 0.0
        %797 = vmatmul.mubr.f32.gmra.mrb[0].mxu0 %v724
        %v798 = vpop.f32.mrb[0].mxu0
        %v799 = vadd.f32 0.0, %v798
        %v800 = vpop.f32.mrb[0].mxu0
        %801 = vmatprep.mubr.f32.mxu0 0.0
        %802 = vmatmul.mubr.f32.gmra.mrb[0].mxu0 %v726
        %v803 = vpop.f32.mrb[0].mxu0
        %v804 = vadd.f32 0.0, %v803
        %v805 = vpop.f32.mrb[0].mxu0
        %806 = vdwg.mxu0
        %v807 = vmul.f32 %v799, 0.17677669
        %v808 = vmul.f32 %v804, 0.17677669
        %v809 = vadd.f32 %v807, %v409
        %v810 = vadd.f32 %v808, %v410
        %v811 = vsel %vm606, %v809, -inf
        %812 = vmax.xlane.f32.xlu0 %v811
        %v813 = vpop.xlane.xlu0 %812
        %v814 = vsel %vm606, %v810, -inf
        %815 = vmax.xlane.f32.xlu0 %v814
        %v816 = vpop.xlane.xlu0 %815
        %v817 = vsub.f32 %v809, %v813
        %v818 = vsub.f32 %v810, %v816
        %v819 = vmul.f32 %v817, 1.442695
        %v820 = vpow.pop %v819
        %v821 = vmul.f32 %v818, 1.442695
        %v822 = vpow.pop %v821
        %v823 = vsel %vm606, %v820, 0.0
        %824 = vadd.xlane.f32.xlu0 %v823
        %v825 = vpop.xlane.xlu0 %824
        %v826 = vsel %vm606, %v822, 0.0
        %827 = vadd.xlane.f32.xlu0 %v826
        %v828 = vpop.xlane.xlu0 %827
        %v829 = vrcp.pop %v825
        %v830 = vrcp.pop %v828
        %v831 = vmul.f32 %v820, %v829
        %v832 = vmul.f32 %v822, %v830
        %833 = vrot.lane.b32.xlu0 %v506, 56
        %v834 = vpop.permute.xlu0 %833
        %835 = vrot.lane.b32.xlu0 %v509, 56
        %v836 = vpop.permute.xlu0 %835
        %v840 = vsel %vm606, %v831, 0
        %v843 = vsel %vm606, %v832, 0
        %845 = vmatprep.subr.mxu0 0.0
        %846 = vmatpush1.msra.mxu0 %v834
        %847 = vmatprep.subr.mxu0 0.0
        %848 = vmatpush1.msra.mxu0 %v836
        %849 = vmatprep.subr.mxu0 0.0
        %850 = vmatpush1.msra.mxu0 0.0
        %851 = vmatprep.subr.mxu0 0.0
        %852 = vmatpush1.msra.mxu0 0.0
        %853 = vmatprep.subr.mxu0 0.0
        %854 = vmatpush1.msra.mxu0 0.0
        %855 = vmatprep.subr.mxu0 0.0
        %856 = vmatpush1.msra.mxu0 0.0
        %857 = vmatprep.subr.mxu0 0.0
        %858 = vmatpush1.msra.mxu0 0.0
        %859 = vmatprep.subr.mxu0 0.0
        %860 = vmatpush1.msra.mxu0 0.0
        %861 = vmatprep.subr.mxu0 0.0
        %862 = vmatpush1.msra.mxu0 0.0
        %863 = vmatprep.subr.mxu0 0.0
        %864 = vmatpush1.msra.mxu0 0.0
        %865 = vmatprep.subr.mxu0 0.0
        %866 = vmatpush1.msra.mxu0 0.0
        %867 = vmatprep.subr.mxu0 0.0
        %868 = vmatpush1.msra.mxu0 0.0
        %869 = vmatprep.subr.mxu0 0.0
        %870 = vmatpush1.msra.mxu0 0.0
        %871 = vmatprep.subr.mxu0 0.0
        %872 = vmatpush1.msra.mxu0 0.0
        %873 = vmatprep.subr.mxu0 0.0
        %874 = vmatpush1.msra.mxu0 0.0
        %875 = vmatprep.subr.mxu0 0.0
        %876 = vmatpush1.msra.mxu0 0.0
        %877 = vmatprep.subr.mxu0 0.0
        %878 = vmatpush1.msra.mxu0 0.0
        %879 = vmatprep.subr.mxu0 0.0
        %880 = vmatpush1.msra.mxu0 0.0
        %881 = vmatprep.subr.mxu0 0.0
        %882 = vmatpush1.msra.mxu0 0.0
        %883 = vmatprep.subr.mxu0 0.0
        %884 = vmatpush1.msra.mxu0 0.0
        %885 = vmatprep.subr.mxu0 0.0
        %886 = vmatpush1.msra.mxu0 0.0
        %887 = vmatprep.subr.mxu0 0.0
        %888 = vmatpush1.msra.mxu0 0.0
        %889 = vmatprep.subr.mxu0 0.0
        %890 = vmatpush1.msra.mxu0 0.0
        %891 = vmatprep.subr.mxu0 0.0
        %892 = vmatpush1.msra.mxu0 0.0
        %893 = vmatprep.subr.mxu0 0.0
        %894 = vmatpush1.msra.mxu0 0.0
        %895 = vmatprep.subr.mxu0 0.0
        %896 = vmatpush1.msra.mxu0 0.0
        %897 = vmatprep.subr.mxu0 0.0
        %898 = vmatpush1.msra.mxu0 0.0
        %899 = vmatprep.subr.mxu0 0.0
        %900 = vmatpush1.msra.mxu0 0.0
        %901 = vmatprep.subr.mxu0 0.0
        %902 = vmatpush1.msra.mxu0 0.0
        %903 = vmatprep.subr.mxu0 0.0
        %904 = vmatpush1.msra.mxu0 0.0
        %905 = vmatprep.subr.mxu0 0.0
        %906 = vmatpush1.msra.mxu0 0.0
        %907 = vmatprep.subr.mxu0 0.0
        %908 = vmatpush1.msra.mxu0 0.0
        %909 = vmatprep.mubr.f32.mxu0 0.0
        %910 = vmatmul.mubr.f32.gmra.mrb[0].mxu0 %v840
        %v911 = vpop.f32.mrb[0].mxu0
        %v912 = vadd.f32 0.0, %v911
        %v913 = vpop.f32.mrb[0].mxu0
        %914 = vmatprep.mubr.f32.mxu0 0.0
        %915 = vmatmul.mubr.f32.gmra.mrb[0].mxu0 %v843
        %v916 = vpop.f32.mrb[0].mxu0
        %v917 = vadd.f32 0.0, %v916
        %v918 = vpop.f32.mrb[0].mxu0
        %919 = vdwg.mxu0
        %920 = vrot.lane.b32.xlu0 %v506, 112
        %v921 = vpop.permute.xlu0 %920
        %922 = vrot.lane.b32.xlu0 %v509, 112
        %v923 = vpop.permute.xlu0 %922
        %924 = vrot.lane.b32.xlu0 %v506, 80
        %v925 = vpop.permute.xlu0 %924
        %926 = vrot.lane.b32.xlu0 %v509, 80
        %v927 = vpop.permute.xlu0 %926
        %v928 = vsel %vm518, %v921, 0
        %v930 = vsel %vm518, %v923, 0
        %v932 = vsel %vm518, %v925, 0
        %v934 = vsel %vm518, %v927, 0
        %936 = vmatprep.subr.mxu0 0.0
        %937 = vmatpush1.xpose.msra.mxu0 %v932
        %938 = vmatprep.subr.mxu0 0.0
        %939 = vmatpush1.xpose.msra.mxu0 %v934
        %940 = vmatprep.subr.mxu0 0.0
        %941 = vmatpush1.xpose.msra.mxu0 0.0
        %942 = vmatprep.subr.mxu0 0.0
        %943 = vmatpush1.xpose.msra.mxu0 0.0
        %944 = vmatprep.subr.mxu0 0.0
        %945 = vmatpush1.xpose.msra.mxu0 0.0
        %946 = vmatprep.subr.mxu0 0.0
        %947 = vmatpush1.xpose.msra.mxu0 0.0
        %948 = vmatprep.subr.mxu0 0.0
        %949 = vmatpush1.xpose.msra.mxu0 0.0
        %950 = vmatprep.subr.mxu0 0.0
        %951 = vmatpush1.xpose.msra.mxu0 0.0
        %952 = vmatprep.subr.mxu0 0.0
        %953 = vmatpush1.xpose.msra.mxu0 0.0
        %954 = vmatprep.subr.mxu0 0.0
        %955 = vmatpush1.xpose.msra.mxu0 0.0
        %956 = vmatprep.subr.mxu0 0.0
        %957 = vmatpush1.xpose.msra.mxu0 0.0
        %958 = vmatprep.subr.mxu0 0.0
        %959 = vmatpush1.xpose.msra.mxu0 0.0
        %960 = vmatprep.subr.mxu0 0.0
        %961 = vmatpush1.xpose.msra.mxu0 0.0
        %962 = vmatprep.subr.mxu0 0.0
        %963 = vmatpush1.xpose.msra.mxu0 0.0
        %964 = vmatprep.subr.mxu0 0.0
        %965 = vmatpush1.xpose.msra.mxu0 0.0
        %966 = vmatprep.subr.mxu0 0.0
        %967 = vmatpush1.xpose.msra.mxu0 0.0
        %968 = vmatprep.subr.mxu0 0.0
        %969 = vmatpush1.xpose.msra.mxu0 0.0
        %970 = vmatprep.subr.mxu0 0.0
        %971 = vmatpush1.xpose.msra.mxu0 0.0
        %972 = vmatprep.subr.mxu0 0.0
        %973 = vmatpush1.xpose.msra.mxu0 0.0
        %974 = vmatprep.subr.mxu0 0.0
        %975 = vmatpush1.xpose.msra.mxu0 0.0
        %976 = vmatprep.subr.mxu0 0.0
        %977 = vmatpush1.xpose.msra.mxu0 0.0
        %978 = vmatprep.subr.mxu0 0.0
        %979 = vmatpush1.xpose.msra.mxu0 0.0
        %980 = vmatprep.subr.mxu0 0.0
        %981 = vmatpush1.xpose.msra.mxu0 0.0
        %982 = vmatprep.subr.mxu0 0.0
        %983 = vmatpush1.xpose.msra.mxu0 0.0
        %984 = vmatprep.subr.mxu0 0.0
        %985 = vmatpush1.xpose.msra.mxu0 0.0
        %986 = vmatprep.subr.mxu0 0.0
        %987 = vmatpush1.xpose.msra.mxu0 0.0
        %988 = vmatprep.subr.mxu0 0.0
        %989 = vmatpush1.xpose.msra.mxu0 0.0
        %990 = vmatprep.subr.mxu0 0.0
        %991 = vmatpush1.xpose.msra.mxu0 0.0
        %992 = vmatprep.subr.mxu0 0.0
        %993 = vmatpush1.xpose.msra.mxu0 0.0
        %994 = vmatprep.subr.mxu0 0.0
        %995 = vmatpush1.xpose.msra.mxu0 0.0
        %996 = vmatprep.subr.mxu0 0.0
        %997 = vmatpush1.xpose.msra.mxu0 0.0
        %998 = vmatprep.subr.mxu0 0.0
        %999 = vmatpush1.xpose.msra.mxu0 0.0
        %1000 = vmatprep.mubr.f32.mxu0 0.0
        %1001 = vmatmul.mubr.f32.gmra.mrb[0].mxu0 %v928
        %v1002 = vpop.f32.mrb[0].mxu0
        %v1003 = vadd.f32 0.0, %v1002
        %v1004 = vpop.f32.mrb[0].mxu0
        %1005 = vmatprep.mubr.f32.mxu0 0.0
        %1006 = vmatmul.mubr.f32.gmra.mrb[0].mxu0 %v930
        %v1007 = vpop.f32.mrb[0].mxu0
        %v1008 = vadd.f32 0.0, %v1007
        %v1009 = vpop.f32.mrb[0].mxu0
        %1010 = vdwg.mxu0
        %v1011 = vmul.f32 %v1003, 0.17677669
        %v1012 = vmul.f32 %v1008, 0.17677669
        %v1013 = vadd.f32 %v1011, %v409
        %v1014 = vadd.f32 %v1012, %v410
        %v1015 = vsel %vm606, %v1013, -inf
        %1016 = vmax.xlane.f32.xlu0 %v1015
        %v1017 = vpop.xlane.xlu0 %1016
        %v1018 = vsel %vm606, %v1014, -inf
        %1019 = vmax.xlane.f32.xlu0 %v1018
        %v1020 = vpop.xlane.xlu0 %1019
        %v1021 = vsub.f32 %v1013, %v1017
        %v1022 = vsub.f32 %v1014, %v1020
        %v1023 = vmul.f32 %v1021, 1.442695
        %v1024 = vpow.pop %v1023
        %v1025 = vmul.f32 %v1022, 1.442695
        %v1026 = vpow.pop %v1025
        %v1027 = vsel %vm606, %v1024, 0.0
        %1028 = vadd.xlane.f32.xlu0 %v1027
        %v1029 = vpop.xlane.xlu0 %1028
        %v1030 = vsel %vm606, %v1026, 0.0
        %1031 = vadd.xlane.f32.xlu0 %v1030
        %v1032 = vpop.xlane.xlu0 %1031
        %v1033 = vrcp.pop %v1029
        %v1034 = vrcp.pop %v1032
        %v1035 = vmul.f32 %v1024, %v1033
        %v1036 = vmul.f32 %v1026, %v1034
        %1037 = vrot.lane.b32.xlu0 %v506, 48
        %v1038 = vpop.permute.xlu0 %1037
        %1039 = vrot.lane.b32.xlu0 %v509, 48
        %v1040 = vpop.permute.xlu0 %1039
        %v1044 = vsel %vm606, %v1035, 0
        %v1047 = vsel %vm606, %v1036, 0
        %1049 = vmatprep.subr.mxu0 0.0
        %1050 = vmatpush1.msra.mxu0 %v1038
        %1051 = vmatprep.subr.mxu0 0.0
        %1052 = vmatpush1.msra.mxu0 %v1040
        %1053 = vmatprep.subr.mxu0 0.0
        %1054 = vmatpush1.msra.mxu0 0.0
        %1055 = vmatprep.subr.mxu0 0.0
        %1056 = vmatpush1.msra.mxu0 0.0
        %1057 = vmatprep.subr.mxu0 0.0
        %1058 = vmatpush1.msra.mxu0 0.0
        %1059 = vmatprep.subr.mxu0 0.0
        %1060 = vmatpush1.msra.mxu0 0.0
        %1061 = vmatprep.subr.mxu0 0.0
        %1062 = vmatpush1.msra.mxu0 0.0
        %1063 = vmatprep.subr.mxu0 0.0
        %1064 = vmatpush1.msra.mxu0 0.0
        %1065 = vmatprep.subr.mxu0 0.0
        %1066 = vmatpush1.msra.mxu0 0.0
        %1067 = vmatprep.subr.mxu0 0.0
        %1068 = vmatpush1.msra.mxu0 0.0
        %1069 = vmatprep.subr.mxu0 0.0
        %1070 = vmatpush1.msra.mxu0 0.0
        %1071 = vmatprep.subr.mxu0 0.0
        %1072 = vmatpush1.msra.mxu0 0.0
        %1073 = vmatprep.subr.mxu0 0.0
        %1074 = vmatpush1.msra.mxu0 0.0
        %1075 = vmatprep.subr.mxu0 0.0
        %1076 = vmatpush1.msra.mxu0 0.0
        %1077 = vmatprep.subr.mxu0 0.0
        %1078 = vmatpush1.msra.mxu0 0.0
        %1079 = vmatprep.subr.mxu0 0.0
        %1080 = vmatpush1.msra.mxu0 0.0
        %1081 = vmatprep.subr.mxu0 0.0
        %1082 = vmatpush1.msra.mxu0 0.0
        %1083 = vmatprep.subr.mxu0 0.0
        %1084 = vmatpush1.msra.mxu0 0.0
        %1085 = vmatprep.subr.mxu0 0.0
        %1086 = vmatpush1.msra.mxu0 0.0
        %1087 = vmatprep.subr.mxu0 0.0
        %1088 = vmatpush1.msra.mxu0 0.0
        %1089 = vmatprep.subr.mxu0 0.0
        %1090 = vmatpush1.msra.mxu0 0.0
        %1091 = vmatprep.subr.mxu0 0.0
        %1092 = vmatpush1.msra.mxu0 0.0
        %1093 = vmatprep.subr.mxu0 0.0
        %1094 = vmatpush1.msra.mxu0 0.0
        %1095 = vmatprep.subr.mxu0 0.0
        %1096 = vmatpush1.msra.mxu0 0.0
        %1097 = vmatprep.subr.mxu0 0.0
        %1098 = vmatpush1.msra.mxu0 0.0
        %1099 = vmatprep.subr.mxu0 0.0
        %1100 = vmatpush1.msra.mxu0 0.0
        %1101 = vmatprep.subr.mxu0 0.0
        %1102 = vmatpush1.msra.mxu0 0.0
        %1103 = vmatprep.subr.mxu0 0.0
        %1104 = vmatpush1.msra.mxu0 0.0
        %1105 = vmatprep.subr.mxu0 0.0
        %1106 = vmatpush1.msra.mxu0 0.0
        %1107 = vmatprep.subr.mxu0 0.0
        %1108 = vmatpush1.msra.mxu0 0.0
        %1109 = vmatprep.subr.mxu0 0.0
        %1110 = vmatpush1.msra.mxu0 0.0
        %1111 = vmatprep.subr.mxu0 0.0
        %1112 = vmatpush1.msra.mxu0 0.0
        %1113 = vmatprep.mubr.f32.mxu0 0.0
        %1114 = vmatmul.mubr.f32.gmra.mrb[0].mxu0 %v1044
        %v1115 = vpop.f32.mrb[0].mxu0
        %v1116 = vadd.f32 0.0, %v1115
        %v1117 = vpop.f32.mrb[0].mxu0
        %1118 = vmatprep.mubr.f32.mxu0 0.0
        %1119 = vmatmul.mubr.f32.gmra.mrb[0].mxu0 %v1047
        %v1120 = vpop.f32.mrb[0].mxu0
        %v1121 = vadd.f32 0.0, %v1120
        %v1122 = vpop.f32.mrb[0].mxu0
        %1123 = vdwg.mxu0
        %1124 = vrot.lane.b32.xlu0 %v506, 104
        %v1125 = vpop.permute.xlu0 %1124
        %1126 = vrot.lane.b32.xlu0 %v509, 104
        %v1127 = vpop.permute.xlu0 %1126
        %1128 = vrot.lane.b32.xlu0 %v506, 72
        %v1129 = vpop.permute.xlu0 %1128
        %1130 = vrot.lane.b32.xlu0 %v509, 72
        %v1131 = vpop.permute.xlu0 %1130
        %v1132 = vsel %vm518, %v1125, 0
        %v1134 = vsel %vm518, %v1127, 0
        %v1136 = vsel %vm518, %v1129, 0
        %v1138 = vsel %vm518, %v1131, 0
        %1140 = vmatprep.subr.mxu0 0.0
        %1141 = vmatpush1.xpose.msra.mxu0 %v1136
        %1142 = vmatprep.subr.mxu0 0.0
        %1143 = vmatpush1.xpose.msra.mxu0 %v1138
        %1144 = vmatprep.subr.mxu0 0.0
        %1145 = vmatpush1.xpose.msra.mxu0 0.0
        %1146 = vmatprep.subr.mxu0 0.0
        %1147 = vmatpush1.xpose.msra.mxu0 0.0
        %1148 = vmatprep.subr.mxu0 0.0
        %1149 = vmatpush1.xpose.msra.mxu0 0.0
        %1150 = vmatprep.subr.mxu0 0.0
        %1151 = vmatpush1.xpose.msra.mxu0 0.0
        %1152 = vmatprep.subr.mxu0 0.0
        %1153 = vmatpush1.xpose.msra.mxu0 0.0
        %1154 = vmatprep.subr.mxu0 0.0
        %1155 = vmatpush1.xpose.msra.mxu0 0.0
        %1156 = vmatprep.subr.mxu0 0.0
        %1157 = vmatpush1.xpose.msra.mxu0 0.0
        %1158 = vmatprep.subr.mxu0 0.0
        %1159 = vmatpush1.xpose.msra.mxu0 0.0
        %1160 = vmatprep.subr.mxu0 0.0
        %1161 = vmatpush1.xpose.msra.mxu0 0.0
        %1162 = vmatprep.subr.mxu0 0.0
        %1163 = vmatpush1.xpose.msra.mxu0 0.0
        %1164 = vmatprep.subr.mxu0 0.0
        %1165 = vmatpush1.xpose.msra.mxu0 0.0
        %1166 = vmatprep.subr.mxu0 0.0
        %1167 = vmatpush1.xpose.msra.mxu0 0.0
        %1168 = vmatprep.subr.mxu0 0.0
        %1169 = vmatpush1.xpose.msra.mxu0 0.0
        %1170 = vmatprep.subr.mxu0 0.0
        %1171 = vmatpush1.xpose.msra.mxu0 0.0
        %1172 = vmatprep.subr.mxu0 0.0
        %1173 = vmatpush1.xpose.msra.mxu0 0.0
        %1174 = vmatprep.subr.mxu0 0.0
        %1175 = vmatpush1.xpose.msra.mxu0 0.0
        %1176 = vmatprep.subr.mxu0 0.0
        %1177 = vmatpush1.xpose.msra.mxu0 0.0
        %1178 = vmatprep.subr.mxu0 0.0
        %1179 = vmatpush1.xpose.msra.mxu0 0.0
        %1180 = vmatprep.subr.mxu0 0.0
        %1181 = vmatpush1.xpose.msra.mxu0 0.0
        %1182 = vmatprep.subr.mxu0 0.0
        %1183 = vmatpush1.xpose.msra.mxu0 0.0
        %1184 = vmatprep.subr.mxu0 0.0
        %1185 = vmatpush1.xpose.msra.mxu0 0.0
        %1186 = vmatprep.subr.mxu0 0.0
        %1187 = vmatpush1.xpose.msra.mxu0 0.0
        %1188 = vmatprep.subr.mxu0 0.0
        %1189 = vmatpush1.xpose.msra.mxu0 0.0
        %1190 = vmatprep.subr.mxu0 0.0
        %1191 = vmatpush1.xpose.msra.mxu0 0.0
        %1192 = vmatprep.subr.mxu0 0.0
        %1193 = vmatpush1.xpose.msra.mxu0 0.0
        %1194 = vmatprep.subr.mxu0 0.0
        %1195 = vmatpush1.xpose.msra.mxu0 0.0
        %1196 = vmatprep.subr.mxu0 0.0
        %1197 = vmatpush1.xpose.msra.mxu0 0.0
        %1198 = vmatprep.subr.mxu0 0.0
        %1199 = vmatpush1.xpose.msra.mxu0 0.0
        %1200 = vmatprep.subr.mxu0 0.0
        %1201 = vmatpush1.xpose.msra.mxu0 0.0
        %1202 = vmatprep.subr.mxu0 0.0
        %1203 = vmatpush1.xpose.msra.mxu0 0.0
        %1204 = vmatprep.mubr.f32.mxu0 0.0
        %1205 = vmatmul.mubr.f32.gmra.mrb[0].mxu0 %v1132
        %v1206 = vpop.f32.mrb[0].mxu0
        %v1207 = vadd.f32 0.0, %v1206
        %v1208 = vpop.f32.mrb[0].mxu0
        %1209 = vmatprep.mubr.f32.mxu0 0.0
        %1210 = vmatmul.mubr.f32.gmra.mrb[0].mxu0 %v1134
        %v1211 = vpop.f32.mrb[0].mxu0
        %v1212 = vadd.f32 0.0, %v1211
        %v1213 = vpop.f32.mrb[0].mxu0
        %1214 = vdwg.mxu0
        %v1215 = vmul.f32 %v1207, 0.17677669
        %v1216 = vmul.f32 %v1212, 0.17677669
        %v1217 = vadd.f32 %v1215, %v409
        %v1218 = vadd.f32 %v1216, %v410
        %v1219 = vsel %vm606, %v1217, -inf
        %1220 = vmax.xlane.f32.xlu0 %v1219
        %v1221 = vpop.xlane.xlu0 %1220
        %v1222 = vsel %vm606, %v1218, -inf
        %1223 = vmax.xlane.f32.xlu0 %v1222
        %v1224 = vpop.xlane.xlu0 %1223
        %v1225 = vsub.f32 %v1217, %v1221
        %v1226 = vsub.f32 %v1218, %v1224
        %v1227 = vmul.f32 %v1225, 1.442695
        %v1228 = vpow.pop %v1227
        %v1229 = vmul.f32 %v1226, 1.442695
        %v1230 = vpow.pop %v1229
        %v1231 = vsel %vm606, %v1228, 0.0
        %1232 = vadd.xlane.f32.xlu0 %v1231
        %v1233 = vpop.xlane.xlu0 %1232
        %v1234 = vsel %vm606, %v1230, 0.0
        %1235 = vadd.xlane.f32.xlu0 %v1234
        %v1236 = vpop.xlane.xlu0 %1235
        %v1237 = vrcp.pop %v1233
        %v1238 = vrcp.pop %v1236
        %v1239 = vmul.f32 %v1228, %v1237
        %v1240 = vmul.f32 %v1230, %v1238
        %1241 = vrot.lane.b32.xlu0 %v506, 40
        %v1242 = vpop.permute.xlu0 %1241
        %1243 = vrot.lane.b32.xlu0 %v509, 40
        %v1244 = vpop.permute.xlu0 %1243
        %v1248 = vsel %vm606, %v1239, 0
        %v1251 = vsel %vm606, %v1240, 0
        %1253 = vmatprep.subr.mxu0 0.0
        %1254 = vmatpush1.msra.mxu0 %v1242
        %1255 = vmatprep.subr.mxu0 0.0
        %1256 = vmatpush1.msra.mxu0 %v1244
        %1257 = vmatprep.subr.mxu0 0.0
        %1258 = vmatpush1.msra.mxu0 0.0
        %1259 = vmatprep.subr.mxu0 0.0
        %1260 = vmatpush1.msra.mxu0 0.0
        %1261 = vmatprep.subr.mxu0 0.0
        %1262 = vmatpush1.msra.mxu0 0.0
        %1263 = vmatprep.subr.mxu0 0.0
        %1264 = vmatpush1.msra.mxu0 0.0
        %1265 = vmatprep.subr.mxu0 0.0
        %1266 = vmatpush1.msra.mxu0 0.0
        %1267 = vmatprep.subr.mxu0 0.0
        %1268 = vmatpush1.msra.mxu0 0.0
        %1269 = vmatprep.subr.mxu0 0.0
        %1270 = vmatpush1.msra.mxu0 0.0
        %1271 = vmatprep.subr.mxu0 0.0
        %1272 = vmatpush1.msra.mxu0 0.0
        %1273 = vmatprep.subr.mxu0 0.0
        %1274 = vmatpush1.msra.mxu0 0.0
        %1275 = vmatprep.subr.mxu0 0.0
        %1276 = vmatpush1.msra.mxu0 0.0
        %1277 = vmatprep.subr.mxu0 0.0
        %1278 = vmatpush1.msra.mxu0 0.0
        %1279 = vmatprep.subr.mxu0 0.0
        %1280 = vmatpush1.msra.mxu0 0.0
        %1281 = vmatprep.subr.mxu0 0.0
        %1282 = vmatpush1.msra.mxu0 0.0
        %1283 = vmatprep.subr.mxu0 0.0
        %1284 = vmatpush1.msra.mxu0 0.0
        %1285 = vmatprep.subr.mxu0 0.0
        %1286 = vmatpush1.msra.mxu0 0.0
        %1287 = vmatprep.subr.mxu0 0.0
        %1288 = vmatpush1.msra.mxu0 0.0
        %1289 = vmatprep.subr.mxu0 0.0
        %1290 = vmatpush1.msra.mxu0 0.0
        %1291 = vmatprep.subr.mxu0 0.0
        %1292 = vmatpush1.msra.mxu0 0.0
        %1293 = vmatprep.subr.mxu0 0.0
        %1294 = vmatpush1.msra.mxu0 0.0
        %1295 = vmatprep.subr.mxu0 0.0
        %1296 = vmatpush1.msra.mxu0 0.0
        %1297 = vmatprep.subr.mxu0 0.0
        %1298 = vmatpush1.msra.mxu0 0.0
        %1299 = vmatprep.subr.mxu0 0.0
        %1300 = vmatpush1.msra.mxu0 0.0
        %1301 = vmatprep.subr.mxu0 0.0
        %1302 = vmatpush1.msra.mxu0 0.0
        %1303 = vmatprep.subr.mxu0 0.0
        %1304 = vmatpush1.msra.mxu0 0.0
        %1305 = vmatprep.subr.mxu0 0.0
        %1306 = vmatpush1.msra.mxu0 0.0
        %1307 = vmatprep.subr.mxu0 0.0
        %1308 = vmatpush1.msra.mxu0 0.0
        %1309 = vmatprep.subr.mxu0 0.0
        %1310 = vmatpush1.msra.mxu0 0.0
        %1311 = vmatprep.subr.mxu0 0.0
        %1312 = vmatpush1.msra.mxu0 0.0
        %1313 = vmatprep.subr.mxu0 0.0
        %1314 = vmatpush1.msra.mxu0 0.0
        %1315 = vmatprep.subr.mxu0 0.0
        %1316 = vmatpush1.msra.mxu0 0.0
        %1317 = vmatprep.mubr.f32.mxu0 0.0
        %1318 = vmatmul.mubr.f32.gmra.mrb[0].mxu0 %v1248
        %v1319 = vpop.f32.mrb[0].mxu0
        %v1320 = vadd.f32 0.0, %v1319
        %v1321 = vpop.f32.mrb[0].mxu0
        %1322 = vmatprep.mubr.f32.mxu0 0.0
        %1323 = vmatmul.mubr.f32.gmra.mrb[0].mxu0 %v1251
        %v1324 = vpop.f32.mrb[0].mxu0
        %v1325 = vadd.f32 0.0, %v1324
        %v1326 = vpop.f32.mrb[0].mxu0
        %1327 = vdwg.mxu0
        %1330 = vrot.lane.b32.xlu0 %v912, 8
        %v1331 = vpop.permute.xlu0 %1330
        %1332 = vrot.lane.b32.xlu0 %v917, 8
        %v1333 = vpop.permute.xlu0 %1332
        %1338 = vrot.lane.b32.xlu0 %v1116, 16
        %v1339 = vpop.permute.xlu0 %1338
        %1340 = vrot.lane.b32.xlu0 %v1121, 16
        %v1341 = vpop.permute.xlu0 %1340
        %1346 = vrot.lane.b32.xlu0 %v1320, 24
        %v1347 = vpop.permute.xlu0 %1346
        %1348 = vrot.lane.b32.xlu0 %v1325, 24
        %v1349 = vpop.permute.xlu0 %1348
        %v1352 = vsel %vm518, %v708, %v1331
        %v1353 = vsel %vm518, %v713, %v1333
        %v1354 = vsel %vm606, %v1352, %v1339
        %v1355 = vsel %vm606, %v1353, %v1341
        %vm1356 = vcmask 195584
        %v1357 = vsel %vm1356, %v1354, %v1347
        %v1358 = vsel %vm1356, %v1355, %v1349
        %v1359 = vpack.c.bf16 %v1358, %v1357
        %v1360 = vld [vmem:[%s385] sm:$0xf]
        %v1361 = vld [vmem:[%s385 + $0x4] sm:$0xf]
        %v1362 = vld [vmem:[%s385 + $0x8] sm:$0xf]
        %v1363 = vld [vmem:[%s385 + $0xc] sm:$0xf]
        %v1364 = vlaneseq
        %v1365 = vshrl.u32 %v1364, 7
        %v1366 = vsub.s32 2, %v1365
        %v1367 = vrot.slane %v408, %v1366
        %v1372 = vunpack.c.l.b16 %v1360
        %v1373 = vunpack.c.l.b16 %v1361
        %v1374 = vunpack.c.l.b16 %v1362
        %v1375 = vunpack.c.l.b16 %v1363
        %v1376 = vpack.c.b16 %v1373, %v1372
        %v1377 = vpack.c.b16 %v1375, %v1374
        %v1381 = vsel %vm411, %v1359, 0
        %1383 = vmatprep.subr.bf16.mxu0 0
        %1384 = vmatpush1.bf16.msra.mxu0 %v1376
        %1385 = vmatprep.subr.bf16.mxu0 0
        %1386 = vmatpush1.bf16.msra.mxu0 %v1377
        %1387 = vmatprep.subr.bf16.mxu0 0
        %1388 = vmatpush1.bf16.msra.mxu0 0
        %1389 = vmatprep.subr.bf16.mxu0 0
        %1390 = vmatpush1.bf16.msra.mxu0 0
        %1391 = vmatprep.subr.bf16.mxu0 0
        %1392 = vmatpush1.bf16.msra.mxu0 0
        %1393 = vmatprep.subr.bf16.mxu0 0
        %1394 = vmatpush1.bf16.msra.mxu0 0
        %1395 = vmatprep.subr.bf16.mxu0 0
        %1396 = vmatpush1.bf16.msra.mxu0 0
        %1397 = vmatprep.subr.bf16.mxu0 0
        %1398 = vmatpush1.bf16.msra.mxu0 0
        %1399 = vmatprep.subr.bf16.mxu0 0
        %1400 = vmatpush1.bf16.msra.mxu0 0
        %1401 = vmatprep.subr.bf16.mxu0 0
        %1402 = vmatpush1.bf16.msra.mxu0 0
        %1403 = vmatprep.subr.bf16.mxu0 0
        %1404 = vmatpush1.bf16.msra.mxu0 0
        %1405 = vmatprep.subr.bf16.mxu0 0
        %1406 = vmatpush1.bf16.msra.mxu0 0
        %1407 = vmatprep.subr.bf16.mxu0 0
        %1408 = vmatpush1.bf16.msra.mxu0 0
        %1409 = vmatprep.subr.bf16.mxu0 0
        %1410 = vmatpush1.bf16.msra.mxu0 0
        %1411 = vmatprep.subr.bf16.mxu0 0
        %1412 = vmatpush1.bf16.msra.mxu0 0
        %1413 = vmatprep.subr.bf16.mxu0 0
        %1414 = vmatpush1.bf16.msra.mxu0 0
        %1415 = vmatprep.mubr.bf16.mxu0 0
        %1416 = vmatmul.mubr.bf16.gmra.mrb[0].mxu0 %v1381
        %v1417 = vpop.f32.mrb[0].mxu0
        %v1418 = vadd.f32 %v1367, %v1417
        %v1419 = vpop.f32.mrb[0].mxu0
        %v1420 = vpop.f32.mrb[0].mxu0
        %v1421 = vadd.f32 %v1367, %v1420
        %v1422 = vpop.f32.mrb[0].mxu0
        %1423 = vdwg.mxu0
        %v1424 = vadd.f32 %v406, %v1418
        %v1425 = vadd.f32 %v407, %v1421
        %v1426 = vsel %vm411, %v1424, 0.0
        %1427 = vadd.xlane.f32.xlu0 %v1426
        %v1428 = vpop.xlane.xlu0 %1427
        %v1429 = vsel %vm411, %v1425, 0.0
        %1430 = vadd.xlane.f32.xlu0 %v1429
        %v1431 = vpop.xlane.xlu0 %1430
        %v1432 = vmul.f32 %v1428, %v418
        %v1433 = vmul.f32 %v1431, %v418
        %v1434 = vsub.f32 %v1424, %v1432
        %v1435 = vsub.f32 %v1425, %v1433
        %v1436 = vmul.f32 %v1434, %v1434
        %v1437 = vmul.f32 %v1435, %v1435
        %v1438 = vsel %vm411, %v1436, 0.0
        %1439 = vadd.xlane.f32.xlu0 %v1438
        %v1440 = vpop.xlane.xlu0 %1439
        %v1441 = vsel %vm411, %v1437, 0.0
        %1442 = vadd.xlane.f32.xlu0 %v1441
        %v1443 = vpop.xlane.xlu0 %1442
        %v1444 = vmul.f32 %v1440, %v418
        %v1445 = vmul.f32 %v1443, %v418
        %v1446 = vadd.f32 %v1444, 1e-05
        %v1447 = vadd.f32 %v1445, 1e-05
        %v1448 = vrsqrt.pop %v1446
        %v1449 = vrsqrt.pop %v1447
        %v1450 = vmul.f32 %v1434, %v1448
        %v1451 = vmul.f32 %v1435, %v1449
        %v1452 = vlaneseq
        %v1453 = vshrl.u32 %v1452, 7
        %v1454 = vsub.s32 3, %v1453
        %v1455 = vrot.slane %v408, %v1454
        %v1456 = vmul.f32 %v1450, %v1455
        %v1457 = vmul.f32 %v1451, %v1455
        %v1458 = vlaneseq
        %v1459 = vshrl.u32 %v1458, 7
        %v1460 = vsub.s32 4, %v1459
        %v1461 = vrot.slane %v408, %v1460
        %v1462 = vadd.f32 %v1456, %v1461
        %v1463 = vadd.f32 %v1457, %v1461
        %v1464 = vpack.c.bf16 %v1463, %v1462
        %v1465 = vld [vmem:[%s390] sm:$0xf]
        %v1466 = vld [vmem:[%s390 + $0x4] sm:$0xf]
        %v1467 = vld [vmem:[%s390 + $0x8] sm:$0xf]
        %v1468 = vld [vmem:[%s390 + $0xc] sm:$0xf]
        %v1469 = vlaneseq
        %v1470 = vshrl.u32 %v1469, 7
        %v1471 = vsub.s32 6, %v1470
        %v1472 = vrot.slane %v408, %v1471
        %v1477 = vunpack.c.l.b16 %v1465
        %v1478 = vunpack.c.l.b16 %v1466
        %v1479 = vunpack.c.l.b16 %v1467
        %v1480 = vunpack.c.l.b16 %v1468
        %v1481 = vpack.c.b16 %v1478, %v1477
        %v1482 = vpack.c.b16 %v1480, %v1479
        %v1486 = vsel %vm411, %v1464, 0
        %1488 = vmatprep.subr.bf16.mxu0 0
        %1489 = vmatpush1.bf16.msra.mxu0 %v1481
        %1490 = vmatprep.subr.bf16.mxu0 0
        %1491 = vmatpush1.bf16.msra.mxu0 %v1482
        %1492 = vmatprep.subr.bf16.mxu0 0
        %1493 = vmatpush1.bf16.msra.mxu0 0
        %1494 = vmatprep.subr.bf16.mxu0 0
        %1495 = vmatpush1.bf16.msra.mxu0 0
        %1496 = vmatprep.subr.bf16.mxu0 0
        %1497 = vmatpush1.bf16.msra.mxu0 0
        %1498 = vmatprep.subr.bf16.mxu0 0
        %1499 = vmatpush1.bf16.msra.mxu0 0
        %1500 = vmatprep.subr.bf16.mxu0 0
        %1501 = vmatpush1.bf16.msra.mxu0 0
        %1502 = vmatprep.subr.bf16.mxu0 0
        %1503 = vmatpush1.bf16.msra.mxu0 0
        %1504 = vmatprep.subr.bf16.mxu0 0
        %1505 = vmatpush1.bf16.msra.mxu0 0
        %1506 = vmatprep.subr.bf16.mxu0 0
        %1507 = vmatpush1.bf16.msra.mxu0 0
        %1508 = vmatprep.subr.bf16.mxu0 0
        %1509 = vmatpush1.bf16.msra.mxu0 0
        %1510 = vmatprep.subr.bf16.mxu0 0
        %1511 = vmatpush1.bf16.msra.mxu0 0
        %1512 = vmatprep.subr.bf16.mxu0 0
        %1513 = vmatpush1.bf16.msra.mxu0 0
        %1514 = vmatprep.subr.bf16.mxu0 0
        %1515 = vmatpush1.bf16.msra.mxu0 0
        %1516 = vmatprep.subr.bf16.mxu0 0
        %1517 = vmatpush1.bf16.msra.mxu0 0
        %1518 = vmatprep.subr.bf16.mxu0 0
        %1519 = vmatpush1.bf16.msra.mxu0 0
        %1520 = vmatprep.mubr.bf16.mxu0 0
        %1521 = vmatmul.mubr.bf16.gmra.mrb[0].mxu0 %v1486
        %v1522 = vpop.f32.mrb[0].mxu0
        %v1523 = vadd.f32 %v1472, %v1522
        %v1524 = vpop.f32.mrb[0].mxu0
        %v1525 = vpop.f32.mrb[0].mxu0
        %v1526 = vadd.f32 %v1472, %v1525
        %v1527 = vpop.f32.mrb[0].mxu0
        %1528 = vdwg.mxu0
        %v1529 = vmax.f32 %v1523, 0.0
        %v1530 = vmax.f32 %v1526, 0.0
        %v1531 = vpack.c.bf16 %v1530, %v1529
        %v1532 = vld [vmem:[%s395] sm:$0xf]
        %v1533 = vld [vmem:[%s395 + $0x4] sm:$0xf]
        %v1534 = vld [vmem:[%s395 + $0x8] sm:$0xf]
        %v1535 = vld [vmem:[%s395 + $0xc] sm:$0xf]
        %v1536 = vld [vmem:[%s395 + $0x10] sm:$0xf]
        %v1537 = vld [vmem:[%s395 + $0x14] sm:$0xf]
        %v1538 = vld [vmem:[%s395 + $0x18] sm:$0xf]
        %v1539 = vld [vmem:[%s395 + $0x1c] sm:$0xf]
        %v1540 = vld [vmem:[%s395 + $0x20] sm:$0xf]
        %v1541 = vld [vmem:[%s395 + $0x24] sm:$0xf]
        %v1542 = vld [vmem:[%s395 + $0x28] sm:$0xf]
        %v1543 = vld [vmem:[%s395 + $0x2c] sm:$0xf]
        %v1544 = vld [vmem:[%s395 + $0x30] sm:$0xf]
        %v1545 = vld [vmem:[%s395 + $0x34] sm:$0xf]
        %v1546 = vld [vmem:[%s395 + $0x38] sm:$0xf]
        %v1547 = vld [vmem:[%s395 + $0x3c] sm:$0xf]
        %v1548 = vlaneseq
        %v1549 = vshrl.u32 %v1548, 7
        %v1550 = vsub.s32 5, %v1549
        %v1551 = vrot.slane %v408, %v1550
        %v1568 = vunpack.c.l.b16 %v1532
        %v1569 = vunpack.c.l.b16 %v1533
        %v1570 = vunpack.c.l.b16 %v1534
        %v1571 = vunpack.c.l.b16 %v1535
        %v1572 = vunpack.c.l.b16 %v1536
        %v1573 = vunpack.c.l.b16 %v1537
        %v1574 = vunpack.c.l.b16 %v1538
        %v1575 = vunpack.c.l.b16 %v1539
        %v1576 = vunpack.c.l.b16 %v1540
        %v1577 = vunpack.c.l.b16 %v1541
        %v1578 = vunpack.c.l.b16 %v1542
        %v1579 = vunpack.c.l.b16 %v1543
        %v1580 = vunpack.c.l.b16 %v1544
        %v1581 = vunpack.c.l.b16 %v1545
        %v1582 = vunpack.c.l.b16 %v1546
        %v1583 = vunpack.c.l.b16 %v1547
        %v1584 = vpack.c.b16 %v1569, %v1568
        %v1585 = vpack.c.b16 %v1571, %v1570
        %v1586 = vpack.c.b16 %v1573, %v1572
        %v1587 = vpack.c.b16 %v1575, %v1574
        %v1588 = vpack.c.b16 %v1577, %v1576
        %v1589 = vpack.c.b16 %v1579, %v1578
        %v1590 = vpack.c.b16 %v1581, %v1580
        %v1591 = vpack.c.b16 %v1583, %v1582
        %1600 = vmatprep.subr.bf16.mxu0 0
        %1601 = vmatpush1.bf16.msra.mxu0 %v1584
        %1602 = vmatprep.subr.bf16.mxu0 0
        %1603 = vmatpush1.bf16.msra.mxu0 %v1585
        %1604 = vmatprep.subr.bf16.mxu0 0
        %1605 = vmatpush1.bf16.msra.mxu0 %v1586
        %1606 = vmatprep.subr.bf16.mxu0 0
        %1607 = vmatpush1.bf16.msra.mxu0 %v1587
        %1608 = vmatprep.subr.bf16.mxu0 0
        %1609 = vmatpush1.bf16.msra.mxu0 %v1588
        %1610 = vmatprep.subr.bf16.mxu0 0
        %1611 = vmatpush1.bf16.msra.mxu0 %v1589
        %1612 = vmatprep.subr.bf16.mxu0 0
        %1613 = vmatpush1.bf16.msra.mxu0 %v1590
        %1614 = vmatprep.subr.bf16.mxu0 0
        %1615 = vmatpush1.bf16.msra.mxu0 %v1591
        %1616 = vmatprep.subr.bf16.mxu0 0
        %1617 = vmatpush1.bf16.msra.mxu0 0
        %1618 = vmatprep.subr.bf16.mxu0 0
        %1619 = vmatpush1.bf16.msra.mxu0 0
        %1620 = vmatprep.subr.bf16.mxu0 0
        %1621 = vmatpush1.bf16.msra.mxu0 0
        %1622 = vmatprep.subr.bf16.mxu0 0
        %1623 = vmatpush1.bf16.msra.mxu0 0
        %1624 = vmatprep.subr.bf16.mxu0 0
        %1625 = vmatpush1.bf16.msra.mxu0 0
        %1626 = vmatprep.subr.bf16.mxu0 0
        %1627 = vmatpush1.bf16.msra.mxu0 0
        %1628 = vmatprep.subr.bf16.mxu0 0
        %1629 = vmatpush1.bf16.msra.mxu0 0
        %1630 = vmatprep.subr.bf16.mxu0 0
        %1631 = vmatpush1.bf16.msra.mxu0 0
        %1632 = vmatprep.mubr.bf16.mxu0 0
        %1633 = vmatmul.mubr.bf16.gmra.mrb[0].mxu0 %v1531
        %v1634 = vpop.f32.mrb[0].mxu0
        %v1635 = vadd.f32 %v1551, %v1634
        %v1636 = vpop.f32.mrb[0].mxu0
        %v1637 = vpop.f32.mrb[0].mxu0
        %v1638 = vadd.f32 %v1551, %v1637
        %v1639 = vpop.f32.mrb[0].mxu0
        %1640 = vdwg.mxu0
        %v1641 = vadd.f32 %v1424, %v1635
        %v1642 = vadd.f32 %v1425, %v1638
        %1643 = vst.msk [vmem:[#allocation2] sm:$0xff] %vm411, %v1641
        %1644 = vst.msk [vmem:[#allocation2 + $0x8] sm:$0xff] %vm411, %v1642
        %p1645 = scmp.eq.s32.totalorder %s21, 1
        // Predicated region
        $region61: #{tpu_custom_call.1} parent=55 // pred_check
          %p1646 = pneg %p1645
        $region62: #{tpu_custom_call.1} parent=55 // pred_check_branch
          %1648 = sbr.rel (%p1646) target = $region64
        $region63: #{tpu_custom_call.1} parent=55 // pred_region
          %v1649 = vld [vmem:[%s8] sm:$0xff]
          %v1650 = vsel %vm411, %v1641, 0.0
          %1651 = vadd.xlane.f32.xlu0 %v1650
          %v1652 = vpop.xlane.xlu0 %1651
          %v1653 = vsel %vm411, %v1642, 0.0
          %1654 = vadd.xlane.f32.xlu0 %v1653
          %v1655 = vpop.xlane.xlu0 %1654
          %v1656 = vmul.f32 %v1652, %v418
          %v1657 = vmul.f32 %v1655, %v418
          %v1658 = vsub.f32 %v1641, %v1656
          %v1659 = vsub.f32 %v1642, %v1657
          %v1660 = vmul.f32 %v1658, %v1658
          %v1661 = vmul.f32 %v1659, %v1659
          %v1662 = vsel %vm411, %v1660, 0.0
          %1663 = vadd.xlane.f32.xlu0 %v1662
          %v1664 = vpop.xlane.xlu0 %1663
          %v1665 = vsel %vm411, %v1661, 0.0
          %1666 = vadd.xlane.f32.xlu0 %v1665
          %v1667 = vpop.xlane.xlu0 %1666
          %v1668 = vmul.f32 %v1664, %v418
          %v1669 = vmul.f32 %v1667, %v418
          %v1670 = vadd.f32 %v1668, 1e-05
          %v1671 = vadd.f32 %v1669, 1e-05
          %v1672 = vrsqrt.pop %v1670
          %v1673 = vrsqrt.pop %v1671
          %v1674 = vmul.f32 %v1658, %v1672
          %v1675 = vmul.f32 %v1659, %v1673
          %v1676 = vlaneseq
          %v1677 = vshrl.u32 %v1676, 7
          %v1678 = vsub.s32 0, %v1677
          %v1679 = vrot.slane %v1649, %v1678
          %v1680 = vmul.f32 %v1674, %v1679
          %v1681 = vmul.f32 %v1675, %v1679
          %v1682 = vlaneseq
          %v1683 = vshrl.u32 %v1682, 7
          %v1684 = vsub.s32 1, %v1683
          %v1685 = vrot.slane %v1649, %v1684
          %v1686 = vadd.f32 %v1680, %v1685
          %v1687 = vadd.f32 %v1681, %v1685
          %v1688 = vpack.c.bf16 %v1687, %v1686
          %v1689 = vld [vmem:[%s7] sm:$0xf]
          %v1690 = vld [vmem:[%s7 + $0x4] sm:$0xf]
          %v1691 = vld [vmem:[%s7 + $0x8] sm:$0xf]
          %v1692 = vld [vmem:[%s7 + $0xc] sm:$0xf]
          %v1693 = vlaneseq
          %v1694 = vshrl.u32 %v1693, 7
          %v1695 = vsub.s32 2, %v1694
          %v1696 = vrot.slane %v1649, %v1695
          %v1701 = vunpack.c.l.b16 %v1689
          %v1702 = vunpack.c.l.b16 %v1690
          %v1703 = vunpack.c.l.b16 %v1691
          %v1704 = vunpack.c.l.b16 %v1692
          %v1705 = vpack.c.b16 %v1702, %v1701
          %v1706 = vpack.c.b16 %v1704, %v1703
          %v1710 = vsel %vm411, %v1688, 0
          %1712 = vmatprep.subr.bf16.mxu0 0
          %1713 = vmatpush1.bf16.msra.mxu0 %v1705
          %1714 = vmatprep.subr.bf16.mxu0 0
          %1715 = vmatpush1.bf16.msra.mxu0 %v1706
          %1716 = vmatprep.subr.bf16.mxu0 0
          %1717 = vmatpush1.bf16.msra.mxu0 0
          %1718 = vmatprep.subr.bf16.mxu0 0
          %1719 = vmatpush1.bf16.msra.mxu0 0
          %1720 = vmatprep.subr.bf16.mxu0 0
          %1721 = vmatpush1.bf16.msra.mxu0 0
          %1722 = vmatprep.subr.bf16.mxu0 0
          %1723 = vmatpush1.bf16.msra.mxu0 0
          %1724 = vmatprep.subr.bf16.mxu0 0
          %1725 = vmatpush1.bf16.msra.mxu0 0
          %1726 = vmatprep.subr.bf16.mxu0 0
          %1727 = vmatpush1.bf16.msra.mxu0 0
          %1728 = vmatprep.subr.bf16.mxu0 0
          %1729 = vmatpush1.bf16.msra.mxu0 0
          %1730 = vmatprep.subr.bf16.mxu0 0
          %1731 = vmatpush1.bf16.msra.mxu0 0
          %1732 = vmatprep.subr.bf16.mxu0 0
          %1733 = vmatpush1.bf16.msra.mxu0 0
          %1734 = vmatprep.subr.bf16.mxu0 0
          %1735 = vmatpush1.bf16.msra.mxu0 0
          %1736 = vmatprep.subr.bf16.mxu0 0
          %1737 = vmatpush1.bf16.msra.mxu0 0
          %1738 = vmatprep.subr.bf16.mxu0 0
          %1739 = vmatpush1.bf16.msra.mxu0 0
          %1740 = vmatprep.subr.bf16.mxu0 0
          %1741 = vmatpush1.bf16.msra.mxu0 0
          %1742 = vmatprep.subr.bf16.mxu0 0
          %1743 = vmatpush1.bf16.msra.mxu0 0
          %1744 = vmatprep.mubr.bf16.mxu0 0
          %1745 = vmatmul.mubr.bf16.gmra.mrb[0].mxu0 %v1710
          %v1746 = vpop.f32.mrb[0].mxu0
          %v1747 = vadd.f32 %v1696, %v1746
          %v1748 = vpop.f32.mrb[0].mxu0
          %v1749 = vpop.f32.mrb[0].mxu0
          %v1750 = vadd.f32 %v1696, %v1749
          %v1751 = vpop.f32.mrb[0].mxu0
          %1752 = vdwg.mxu0
          %1753 = vst [vmem:[#allocation3] sm:$0xff] %v1747
          %1754 = vst [vmem:[#allocation3 + $0x8] sm:$0xff] %v1750
        $region64: #{tpu_custom_call.1} parent=55 // pred_fallthru
          _
        // Predicated region
        $region65: #{tpu_custom_call.1} parent=55 // pred_check
          %p1755 = pneg %p248
        $region66: #{tpu_custom_call.1} parent=55 // pred_check_branch
          %1757 = sbr.rel (%p1755) target = $region68
        $region67: #{tpu_custom_call.1} parent=55 // pred_region
          %s1759 = ssub.s32 256, 256
          %1760 = vsyncadd [#allocation4], %s1759
          %s1761 = sshll.u32 [#allocation3], 4
          %s1762 = int_to_ptr.vmem [resolvable:$true] %s1761
          %1767 = dma.vmem_to_hbm [thread:$0]  %s1762, 256, %s9, [#allocation4], 128, 128, 8
        $region68: #{tpu_custom_call.1} parent=55 // pred_fallthru
          _
        // Predicated region
        $region69: #{tpu_custom_call.1} parent=55 // pred_check
          %p1768 = pneg %p248
        $region70: #{tpu_custom_call.1} parent=55 // pred_check_branch
          %1770 = sbr.rel (%p1768) target = $region72
        $region71: #{tpu_custom_call.1} parent=55 // pred_region
          %1771 = dma.done [#allocation4], 256
        $region72: #{tpu_custom_call.1} parent=55 // pred_fallthru
          _
      $region56: #{tpu_custom_call.1} parent=5 // pred_fallthru
        _
      %p1772 = scmp.le.s32.totalorder 2, %s16
      // Predicated region
      $region73: #{tpu_custom_call.1} parent=5 // pred_check
        %p1773 = pneg %p1772
      $region74: #{tpu_custom_call.1} parent=5 // pred_check_branch
        %1775 = sbr.rel (%p1773) target = $region76
      $region75: #{tpu_custom_call.1} parent=5 // pred_region
        %s1776 = ssub.s32 %s16, 2
      $region76: #{tpu_custom_call.1} parent=5 // pred_fallthru
        _
    $region6: #{tpu_custom_call.1} parent=1 // loop_footer
      %s20 = sadd.s32 1, %s16
    $region7: #{tpu_custom_call.1} parent=1 // loop_footer_branch
      %15 = sbr.rel target = $region3
    $region8: #{tpu_custom_call.1} parent=1 // loop_exit
      _
    %1777 = vsyncpa [#allocation4], 1
    %s1778 = scalar_lea.sflag [#allocation4], 1
    %1779 = vsyncpa %s1778, 1

</llo_original>
